<compile_context>
chip_gen: v6e
topology: v6e:2x2x1
jax: 0.10.0
libtpu: 0.0.40
codegen_flags: <defaults>
</compile_context>

<pallas_src>
import functools

import jax
import jax.numpy as jnp
from jax.experimental import pallas as pl
from jax.experimental.pallas import tpu as pltpu

LANE = 128
MAX_TILE = 512  # review: 256-512 tiles amortize per-step overhead / fill MXU


def _round_up(n, m):
    return ((n + m - 1) // m) * m


def _pick_tile(n, cap=MAX_TILE):
    return min(cap, _round_up(n, LANE))


def _pad_to(a, shape):
    pads = [(0, t - s) for s, t in zip(a.shape, shape)]
    return jnp.pad(a, pads)


# --------------------------------------------------------------------------
# Kernel 1: fused node projection  h = x @ [W | W@att_src | W@att_dst]
# --------------------------------------------------------------------------
def _proj_kernel(x_ref, w_ref, h_ref):
    h_ref[...] = jnp.dot(x_ref[...], w_ref[...],
                         preferred_element_type=jnp.float32).astype(h_ref.dtype)


def project_nodes(x, w, *, tile_m):
    n, f = x.shape
    c = w.shape[1]
    vmem = 2 * (tile_m * f * 2 + f * c * 2 + tile_m * c * 2) + (2 << 20)
    return pl.pallas_call(
        _proj_kernel,
        out_shape=jax.ShapeDtypeStruct((n, c), jnp.bfloat16),
        grid_spec=pltpu.PrefetchScalarGridSpec(
            num_scalar_prefetch=0,
            grid=(n // tile_m,),
            in_specs=[pl.BlockSpec((tile_m, f), lambda i: (i, 0)),
                      pl.BlockSpec((f, c), lambda i: (0, 0))],   # W resident
            out_specs=pl.BlockSpec((tile_m, c), lambda i: (i, 0)),
        ),
        compiler_params=pltpu.CompilerParams(
            dimension_semantics=("parallel",),
            vmem_limit_bytes=min(48 << 20, max(16 << 20, int(vmem * 1.5))),
        ),
        cost_estimate=pl.CostEstimate(
            flops=int(2 * n * f * c), transcendentals=0,
            bytes_accessed=int(2 * n * f + 2 * f * c + 2 * n * c)),
    )(x, w)


# --------------------------------------------------------------------------
# Kernel 2: masked-softmax GAT aggregation (online softmax over src tiles,
#           block-sparse src-tile skipping), fused with the Linear head.
# --------------------------------------------------------------------------
def _gat_agg_kernel(tile_idx_ref, tile_cnt_ref,            # scalar prefetch (SMEM)
                    a_d_ref, a_s_ref, adj_ref, h_src_ref,
                    b_ref, wlin_ref, blin_ref, out_ref,
                    m_sc, l_sc, acc_sc, *, tile_s, src_resident):
    i = pl.program_id(0)
    j = pl.program_id(1)

    @pl.when(j == 0)
    def _init():
        m_sc[...] = jnp.full_like(m_sc, -1e30)
        l_sc[...] = jnp.zeros_like(l_sc)
        acc_sc[...] = jnp.zeros_like(acc_sc)

    # skip (dst, src) tile pairs that contain no edges at all
    @pl.when(j < tile_cnt_ref[i])
    def _accumulate():
        mask = adj_ref[...] != 0                           # int8 adjacency -> bool
        e = a_d_ref[...] + a_s_ref[...]                    # [td, ts] f32, dst-major
        e = jnp.maximum(e, 0.2 * e)                        # LeakyReLU(0.2)
        e = jnp.where(mask, e, -1e30)

        m_prev = m_sc[...]
        m_new = jnp.maximum(m_prev, jnp.max(e, axis=-1, keepdims=True))
        corr = jnp.exp(m_prev - m_new)
        # second mask select is required: rows with no edge in this tile must
        # keep p == 0 (m_new can still be -1e30 for them).
        p = jnp.where(mask, jnp.exp(e - m_new), 0.0)       # [td, ts] f32

        if src_resident:
            row0 = pl.multiple_of(tile_idx_ref[i, j] * tile_s, tile_s)
            h_blk = h_src_ref[pl.ds(row0, tile_s), :]      # slice resident table
        else:
            h_blk = h_src_ref[...]                         # streamed tile

        m_sc[...] = m_new
        l_sc[...] = corr * l_sc[...] + jnp.sum(p, axis=-1, keepdims=True)
        acc_sc[...] = corr * acc_sc[...] + jnp.dot(
            p.astype(h_blk.dtype), h_blk, preferred_element_type=jnp.float32)

    @pl.when(j == pl.num_programs(1) - 1)
    def _finalize():
        denom = l_sc[...]
        inv = pl.reciprocal(jnp.where(denom > 0.0, denom, 1.0), approx=True)
        agg = acc_sc[...] * inv + b_ref[...]               # GAT output (+bias), f32
        out_ref[...] = (jnp.dot(agg.astype(wlin_ref.dtype), wlin_ref[...],
                                preferred_element_type=jnp.float32)
                        + blin_ref[...])


def _tile_csr(adj_ds, tile_d, tile_s):
    """Per-dst-tile compacted list of non-empty src tiles (+ counts)."""
    nd, ns = adj_ds.shape
    ndt, nst = nd // tile_d, ns // tile_s
    blk = adj_ds.reshape(ndt, tile_d, nst, tile_s)
    nz = jnp.any(blk != 0, axis=(1, 3)).astype(jnp.int32)       # [ndt, nst]
    cnt = jnp.sum(nz, axis=1).astype(jnp.int32)                 # [ndt]
    order = jnp.argsort(1 - nz, axis=1).astype(jnp.int32)       # non-empty first
    last = jnp.take_along_axis(order, jnp.maximum(cnt - 1, 0)[:, None], axis=1)
    col = jnp.arange(nst, dtype=jnp.int32)[None, :]
    # padded entries repeat the last valid tile so the pipeline elides re-DMA
    tile_idx = jnp.where(col < cnt[:, None], order, last).astype(jnp.int32)
    return tile_idx, cnt


def gat_aggregate(a_dst, a_src, adj, h_src, b, w_lin, b_lin,
                  *, tile_d, tile_s, src_resident):
    nd = a_dst.shape[0]
    ns, c = h_src.shape
    fo = w_lin.shape[1]
    ndt, nst = nd // tile_d, ns // tile_s

    tile_idx, tile_cnt = _tile_csr(adj, tile_d, tile_s)

    if src_resident:
        # whole src feature table stays in VMEM for all dst tiles
        h_spec = pl.BlockSpec((ns, c), lambda i, j, ti, tc: (0, 0))
    else:
        h_spec = pl.BlockSpec((tile_s, c), lambda i, j, ti, tc: (ti[i, j], 0))

    vmem = (2 * tile_d * tile_s                                  # adj int8
            + (2 * ns * c * 2 if src_resident else 2 * tile_s * c * 2)
            + 2 * (tile_d + tile_s) * 4                          # a_dst / a_src
            + 2 * (c * 4 + c * fo * 2 + fo * 4)                  # b, w_lin, b_lin
            + 2 * tile_d * fo * 4                                # out tile
            + tile_d * (2 + c) * 4)                              # scratch m/l/acc
    vmem_limit = min(48 << 20, max(16 << 20, int(vmem * 1.5)))   # fits v7x 64MiB/TC

    flops = 2 * nd * ns * c + 2 * nd * c * fo + 8 * nd * ns
    bytes_accessed = nd * ns + 2 * ns * c + 4 * (nd + ns) + 4 * nd * fo + 2 * c * fo

    kernel = functools.partial(_gat_agg_kernel, tile_s=tile_s,
                               src_resident=src_resident)

    return pl.pallas_call(
        kernel,
        out_shape=jax.ShapeDtypeStruct((nd, fo), jnp.float32),
        grid_spec=pltpu.PrefetchScalarGridSpec(
            num_scalar_prefetch=2,
            grid=(ndt, nst),
            in_specs=[
                pl.BlockSpec((tile_d, 1), lambda i, j, ti, tc: (i, 0)),         # a_dst
                pl.BlockSpec((1, tile_s), lambda i, j, ti, tc: (0, ti[i, j])),  # a_src
                pl.BlockSpec((tile_d, tile_s),
                             lambda i, j, ti, tc: (i, ti[i, j])),               # adj int8
                h_spec,                                                         # h_src
                pl.BlockSpec((1, c), lambda i, j, ti, tc: (0, 0)),              # GAT bias
                pl.BlockSpec((c, fo), lambda i, j, ti, tc: (0, 0)),             # Linear W
                pl.BlockSpec((1, fo), lambda i, j, ti, tc: (0, 0)),             # Linear b
            ],
            out_specs=pl.BlockSpec((tile_d, fo), lambda i, j, ti, tc: (i, 0)),
            scratch_shapes=[
                pltpu.VMEM((tile_d, 1), jnp.float32),   # running max
                pltpu.VMEM((tile_d, 1), jnp.float32),   # running denom
                pltpu.VMEM((tile_d, c), jnp.float32),   # running aggregate
            ],
        ),
        compiler_params=pltpu.CompilerParams(
            dimension_semantics=("parallel", "arbitrary"),
            vmem_limit_bytes=vmem_limit,
        ),
        cost_estimate=pl.CostEstimate(
            flops=int(flops), transcendentals=int(nd * ns),
            bytes_accessed=int(bytes_accessed)),
    )(tile_idx, tile_cnt, a_dst, a_src, adj, h_src, b, w_lin, b_lin)


# --------------------------------------------------------------------------
# Parameters + forward pass (== HeteroGAT.forward)
# --------------------------------------------------------------------------
def init_params(key, f_user, f_item, hidden):
    ks = jax.random.split(key, 12)
    s = 0.1
    return {
        # GATConv ('users','edge','items'): shared lin, att_src/att_dst, bias
        "w_ui":     s * jax.random.normal(ks[0], (f_user, hidden), jnp.float32),
        "att_s_ui": s * jax.random.normal(ks[1], (1, hidden), jnp.float32),
        "att_d_ui": s * jax.random.normal(ks[2], (1, hidden), jnp.float32),
        "b_ui":     s * jax.random.normal(ks[3], (1, hidden), jnp.float32),
        # GATConv ('items','edge','users')
        "w_iu":     s * jax.random.normal(ks[4], (f_item, hidden), jnp.float32),
        "att_s_iu": s * jax.random.normal(ks[5], (1, hidden), jnp.float32),
        "att_d_iu": s * jax.random.normal(ks[6], (1, hidden), jnp.float32),
        "b_iu":     s * jax.random.normal(ks[7], (1, hidden), jnp.float32),
        # user_linear: hidden -> f_user ; item_linear: hidden -> f_item
        # (stored pre-transposed [in, out] for right-multiplication)
        "w_user_lin": s * jax.random.normal(ks[8], (hidden, f_user), jnp.float32),
        "b_user_lin": s * jax.random.normal(ks[9], (1, f_user), jnp.float32),
        "w_item_lin": s * jax.random.normal(ks[10], (hidden, f_item), jnp.float32),
        "b_item_lin": s * jax.random.normal(ks[11], (1, f_item), jnp.float32),
    }


def hetero_gat_forward(params, x_users, x_items, adj_ui):
    nu, fu = x_users.shape
    ni, fi = x_items.shape
    hidden = params["w_ui"].shape[1]
    assert fu == fi, "PyG GATConv(int in_channels) shares one projection: F_user must equal F_item"
    f32, bf16 = jnp.float32, jnp.bfloat16

    cpad = _round_up(hidden, LANE)
    fpad = _round_up(max(fu, fi), LANE)
    fup = _round_up(fu, LANE)
    fip = _round_up(fi, LANE)

    t_user = _pick_tile(nu)
    t_item = _pick_tile(ni)
    nup = _round_up(nu, t_user)
    nip = _round_up(ni, t_item)

    # Fold the two per-node attention-score columns into spare lanes of the
    # hidden slab when possible; their junk contribution to the aggregate is
    # killed by the zero-padded rows of the fused Linear head.
    if cpad - hidden >= 2:
        wcols, col_s, col_d = cpad, hidden, hidden + 1
    else:
        wcols, col_s, col_d = cpad + LANE, cpad, cpad + 1

    def build_w(w_feat, w_src_rel, att_src, w_dst_rel, att_dst):
        # (x @ W) . a  ==  x @ (W @ a^T): fold scores into the projection matmul
        w = jnp.zeros((fpad, wcols), f32)
        w = w.at[:w_feat.shape[0], :hidden].set(w_feat)
        w = w.at[:w_src_rel.shape[0], col_s].set((w_src_rel @ att_src.reshape(-1, 1))[:, 0])
        w = w.at[:w_dst_rel.shape[0], col_d].set((w_dst_rel @ att_dst.reshape(-1, 1))[:, 0])
        return w.astype(bf16)

    # users: src of u->i (w_ui, att_s_ui); dst of i->u (w_iu, att_d_iu)
    w_u = build_w(params["w_ui"], params["w_ui"], params["att_s_ui"],
                  params["w_iu"], params["att_d_iu"])
    # items: src of i->u (w_iu, att_s_iu); dst of u->i (w_ui, att_d_ui)
    w_i = build_w(params["w_iu"], params["w_iu"], params["att_s_iu"],
                  params["w_ui"], params["att_d_ui"])

    xu = _pad_to(x_users, (nup, fpad)).astype(bf16)
    xi = _pad_to(x_items, (nip, fpad)).astype(bf16)

    h_u = project_nodes(xu, w_u, tile_m=t_user)          # [nup, wcols] bf16
    h_i = project_nodes(xi, w_i, tile_m=t_item)          # [nip, wcols] bf16

    h_src_ui = h_u[:, :cpad]                             # users as src  (u->i)
    a_src_ui = h_u[:, col_s].astype(f32).reshape(1, nup)
    a_dst_iu = h_u[:, col_d].astype(f32).reshape(nup, 1)
    h_src_iu = h_i[:, :cpad]                             # items as src  (i->u)
    a_src_iu = h_i[:, col_s].astype(f32).reshape(1, nip)
    a_dst_ui = h_i[:, col_d].astype(f32).reshape(nip, 1)

    # adjacency: both dst-major orientations materialized once, as int8
    edge = adj_ui != 0
    adj_users_dst = _pad_to(edge, (nup, nip)).astype(jnp.int8)    # [users(dst), items(src)]
    adj_items_dst = _pad_to(edge.T, (nip, nup)).astype(jnp.int8)  # [items(dst), users(src)]

    b_ui = _pad_to(params["b_ui"], (1, cpad)).astype(f32)
    b_iu = _pad_to(params["b_iu"], (1, cpad)).astype(f32)
    w_user_lin = _pad_to(params["w_user_lin"], (cpad, fup)).astype(bf16)
    b_user_lin = _pad_to(params["b_user_lin"], (1, fup)).astype(f32)
    w_item_lin = _pad_to(params["w_item_lin"], (cpad, fip)).astype(bf16)
    b_item_lin = _pad_to(params["b_item_lin"], (1, fip)).astype(f32)

    # keep the whole src feature table resident in VMEM when it is small
    res_u = nup * cpad * 2 <= (6 << 20)
    res_i = nip * cpad * 2 <= (6 << 20)

    # users -> items GATConv, fused with user_linear  => item_out [Ni, Fu]
    item_out = gat_aggregate(a_dst_ui, a_src_ui, adj_items_dst, h_src_ui,
                             b_ui, w_user_lin, b_user_lin,
                             tile_d=t_item, tile_s=t_user,
                             src_resident=res_u)[:ni, :fu]
    # items -> users GATConv, fused with item_linear  => user_out [Nu, Fi]
    user_out = gat_aggregate(a_dst_iu, a_src_iu, adj_users_dst, h_src_iu,
                             b_iu, w_item_lin, b_item_lin,
                             tile_d=t_user, tile_s=t_item,
                             src_resident=res_i)[:nu, :fi]
    return user_out, item_out


# --------------------------------------------------------------------------
# Pure-JAX reference (f32) for correctness checking
# --------------------------------------------------------------------------
def reference_forward(params, x_users, x_items, adj_ui):
    def gat(x_src, x_dst, adj_sd, w, att_s, att_d, b):
        h_s = x_src @ w
        h_d = x_dst @ w
        e = (jnp.sum(h_s * att_s, axis=-1, keepdims=True)
             + jnp.sum(h_d * att_d, axis=-1)[None, :])            # [Ns, Nd]
        e = jnp.where(e > 0, e, 0.2 * e)
        mask = adj_sd > 0.5
        e = jnp.where(mask, e, -1e30)
        e = e - jnp.max(e, axis=0, keepdims=True)
        p = jnp.where(mask, jnp.exp(e), 0.0)
        den = jnp.sum(p, axis=0, keepdims=True)
        alpha = p / jnp.where(den > 0, den, 1.0)
        return alpha.T @ h_s + b                                  # [Nd, C]

    out_items = gat(x_users, x_items, adj_ui, params["w_ui"],
                    params["att_s_ui"], params["att_d_ui"], params["b_ui"])
    out_users = gat(x_items, x_users, adj_ui.T, params["w_iu"],
                    params["att_s_iu"], params["att_d_iu"], params["b_iu"])
    user_out = out_users @ params["w_item_lin"] + params["b_item_lin"]
    item_out = out_items @ params["w_user_lin"] + params["b_user_lin"]
    return user_out, item_out


if __name__ == "__main__":
    N_USERS, N_ITEMS = 8, 12
    F_USER = F_ITEM = 16          # must match (shared GATConv projection)
    HIDDEN = 32

    root = jax.random.PRNGKey(0)
    k_xu, k_xi, k_adj, k_par = jax.random.split(root, 4)

    x_users = jax.random.normal(k_xu, (N_USERS, F_USER), jnp.float32)
    x_items = jax.random.normal(k_xi, (N_ITEMS, F_ITEM), jnp.float32)

    # dense edge mask users->items; guarantee every node has >=1 incident edge
    adj_ui = (jax.random.uniform(k_adj, (N_USERS, N_ITEMS)) < 0.4).astype(jnp.float32)
    pattern = (jnp.arange(N_USERS)[:, None] ==
               (jnp.arange(N_ITEMS)[None, :] % N_USERS)).astype(jnp.float32)
    adj_ui = jnp.maximum(adj_ui, pattern)

    params = init_params(k_par, F_USER, F_ITEM, HIDDEN)

    fwd = jax.jit(hetero_gat_forward)
    user_out, item_out = fwd(params, x_users, x_items, adj_ui)
    jax.block_until_ready((user_out, item_out))

    ref_user, ref_item = reference_forward(params, x_users, x_items, adj_ui)

    assert user_out.shape == (N_USERS, F_ITEM)
    assert item_out.shape == (N_ITEMS, F_USER)
    assert bool(jnp.all(jnp.isfinite(user_out))) and bool(jnp.all(jnp.isfinite(item_out)))
    assert bool(jnp.allclose(user_out, ref_user, rtol=5e-2, atol=5e-2)), \
        float(jnp.max(jnp.abs(user_out - ref_user)))
    assert bool(jnp.allclose(item_out, ref_item, rtol=5e-2, atol=5e-2)), \
        float(jnp.max(jnp.abs(item_out - ref_item)))
    print("KERNEL_OK")
</pallas_src>

<mosaic_0001>
module attributes {stable_mosaic.version = 11 : i64} {
  func.func @_proj_kernel(%arg0: i32, %arg1: memref<128x128xbf16, #tpu.memory_space<vmem>>, %arg2: memref<128x128xbf16, #tpu.memory_space<vmem>>, %arg3: memref<128x128xbf16, #tpu.memory_space<vmem>>) attributes {dimension_semantics = [#tpu.dimension_semantics<parallel>], iteration_bounds = array<i64: 1>, scalar_prefetch = 0 : i64, scratch_operands = 0 : i64, tpu.core_type = #tpu.core_type<tc>, window_params = [{transform_indices = @transform_0, window_bounds = array<i64: 128, 128>}, {pipeline_mode = #tpu.pipeline_mode<synchronous>, transform_indices = @transform_1, window_bounds = array<i64: 128, 128>}, {transform_indices = @transform_2, window_bounds = array<i64: 128, 128>}]} {
    %c0 = arith.constant 0 : index
    %c0_0 = arith.constant 0 : index
    %0 = vector.load %arg1[%c0, %c0_0] : memref<128x128xbf16, #tpu.memory_space<vmem>>, vector<128x128xbf16>
    %c0_1 = arith.constant 0 : index
    %c0_2 = arith.constant 0 : index
    %1 = vector.load %arg2[%c0_1, %c0_2] : memref<128x128xbf16, #tpu.memory_space<vmem>>, vector<128x128xbf16>
    %cst = arith.constant dense<0.000000e+00> : vector<128x128xf32>
    %2 = tpu.matmul %0, %1, %cst {dimension_numbers = #tpu.dot_dimension_numbers<[1], [0], [0], [1], [0, 0, 1, 1], [], []>} : vector<128x128xbf16>, vector<128x128xbf16>, vector<128x128xf32> -> vector<128x128xf32>
    %3 = arith.truncf %2 : vector<128x128xf32> to vector<128x128xbf16>
    %c0_3 = arith.constant 0 : index
    %c0_4 = arith.constant 0 : index
    %4 = vector.load %arg3[%c0_3, %c0_4] : memref<128x128xbf16, #tpu.memory_space<vmem>>, vector<128x128xbf16>
    tpu.vector_store %arg3[%c0_3, %c0_4], %3 {strides = array<i32>} : memref<128x128xbf16, #tpu.memory_space<vmem>>, vector<128x128xbf16>,
    return
  }
  func.func @transform_0(%arg0: i32) -> (i32, i32) {
    %c0_i32 = arith.constant 0 : i32
    %c0_i32_0 = arith.constant 0 : i32
    return %arg0, %c0_i32 : i32, i32
  }
  func.func @transform_1(%arg0: i32) -> (i32, i32) {
    %c0_i32 = arith.constant 0 : i32
    %c0_i32_0 = arith.constant 0 : i32
    %c0_i32_1 = arith.constant 0 : i32
    return %c0_i32, %c0_i32_0 : i32, i32
  }
  func.func @transform_2(%arg0: i32) -> (i32, i32) {
    %c0_i32 = arith.constant 0 : i32
    %c0_i32_0 = arith.constant 0 : i32
    return %arg0, %c0_i32 : i32, i32
  }
}

module attributes {stable_mosaic.version = 11 : i64} {
  func.func @_gat_agg_kernel(%arg0: i32, %arg1: i32, %arg2: memref<1x1xi32, #tpu.memory_space<smem>>, %arg3: memref<1xi32, #tpu.memory_space<smem>>, %arg4: memref<128x1xf32, #tpu.memory_space<vmem>>, %arg5: memref<1x128xf32, #tpu.memory_space<vmem>>, %arg6: memref<128x128xi8, #tpu.memory_space<vmem>>, %arg7: memref<128x128xbf16, #tpu.memory_space<vmem>>, %arg8: memref<1x128xf32, #tpu.memory_space<vmem>>, %arg9: memref<128x128xbf16, #tpu.memory_space<vmem>>, %arg10: memref<1x128xf32, #tpu.memory_space<vmem>>, %arg11: memref<128x128xf32, #tpu.memory_space<vmem>>, %arg12: memref<128x1xf32, #tpu.memory_space<vmem>>, %arg13: memref<128x1xf32, #tpu.memory_space<vmem>>, %arg14: memref<128x128xf32, #tpu.memory_space<vmem>>) attributes {dimension_semantics = [#tpu.dimension_semantics<parallel>, #tpu.dimension_semantics<arbitrary>], iteration_bounds = array<i64: 1, 1>, scalar_prefetch = 2 : i64, scratch_operands = 3 : i64, tpu.core_type = #tpu.core_type<tc>, window_params = [{transform_indices = @transform_0, window_bounds = array<i64: 128, 1>}, {transform_indices = @transform_1, window_bounds = array<i64: 1, 128>}, {transform_indices = @transform_2, window_bounds = array<i64: 128, 128>}, {pipeline_mode = #tpu.pipeline_mode<synchronous>, transform_indices = @transform_3, window_bounds = array<i64: 128, 128>}, {pipeline_mode = #tpu.pipeline_mode<synchronous>, transform_indices = @transform_4, window_bounds = array<i64: 1, 128>}, {pipeline_mode = #tpu.pipeline_mode<synchronous>, transform_indices = @transform_5, window_bounds = array<i64: 128, 128>}, {pipeline_mode = #tpu.pipeline_mode<synchronous>, transform_indices = @transform_6, window_bounds = array<i64: 1, 128>}, {transform_indices = @transform_7, window_bounds = array<i64: 128, 128>}]} {
    %c0_i32 = arith.constant 0 : i32
    %0 = arith.cmpi eq, %arg1, %c0_i32 : i32
    %1 = arith.extui %0 : i1 to i32
    %c0_i32_0 = arith.constant 0 : i32
    %2 = arith.cmpi ne, %1, %c0_i32_0 : i32
    scf.if %2 {
      %cst = arith.constant -1.000000e+30 : f32
      %11 = vector.broadcast %cst : f32 to vector<128x1xf32>
      %c0 = arith.constant 0 : index
      %c0_4 = arith.constant 0 : index
      %12 = vector.load %arg12[%c0, %c0_4] : memref<128x1xf32, #tpu.memory_space<vmem>>, vector<128x1xf32>
      tpu.vector_store %arg12[%c0, %c0_4], %11 {strides = array<i32>} : memref<128x1xf32, #tpu.memory_space<vmem>>, vector<128x1xf32>,
      %cst_5 = arith.constant 0.000000e+00 : f32
      %13 = vector.broadcast %cst_5 : f32 to vector<128x1xf32>
      %c0_6 = arith.constant 0 : index
      %c0_7 = arith.constant 0 : index
      %14 = vector.load %arg13[%c0_6, %c0_7] : memref<128x1xf32, #tpu.memory_space<vmem>>, vector<128x1xf32>
      tpu.vector_store %arg13[%c0_6, %c0_7], %13 {strides = array<i32>} : memref<128x1xf32, #tpu.memory_space<vmem>>, vector<128x1xf32>,
      %cst_8 = arith.constant 0.000000e+00 : f32
      %15 = vector.broadcast %cst_8 : f32 to vector<128x128xf32>
      %c0_9 = arith.constant 0 : index
      %c0_10 = arith.constant 0 : index
      %16 = vector.load %arg14[%c0_9, %c0_10] : memref<128x128xf32, #tpu.memory_space<vmem>>, vector<128x128xf32>
      tpu.vector_store %arg14[%c0_9, %c0_10], %15 {strides = array<i32>} : memref<128x128xf32, #tpu.memory_space<vmem>>, vector<128x128xf32>,
    } else {
    }
    %3 = arith.index_cast %arg0 : i32 to index
    %4 = memref.load %arg3[%3] : memref<1xi32, #tpu.memory_space<smem>>
    %5 = arith.cmpi slt, %arg1, %4 : i32
    %6 = arith.extui %5 : i1 to i32
    %c0_i32_1 = arith.constant 0 : i32
    %7 = arith.cmpi ne, %6, %c0_i32_1 : i32
    scf.if %7 {
      %c0 = arith.constant 0 : index
      %c0_4 = arith.constant 0 : index
      %11 = vector.load %arg6[%c0, %c0_4] : memref<128x128xi8, #tpu.memory_space<vmem>>, vector<128x128xi8>
      %c0_i8 = arith.constant 0 : i8
      %12 = vector.broadcast %c0_i8 : i8 to vector<128x128xi8>
      %13 = arith.cmpi ne, %11, %12 : vector<128x128xi8>
      %c0_5 = arith.constant 0 : index
      %c0_6 = arith.constant 0 : index
      %14 = vector.load %arg4[%c0_5, %c0_6] : memref<128x1xf32, #tpu.memory_space<vmem>>, vector<128x1xf32>
      %c0_7 = arith.constant 0 : index
      %c0_8 = arith.constant 0 : index
      %15 = vector.load %arg5[%c0_7, %c0_8] : memref<1x128xf32, #tpu.memory_space<vmem>>, vector<1x128xf32>
      %16 = vector.broadcast %14 : vector<128x1xf32> to vector<128x128xf32>
      %17 = vector.broadcast %15 : vector<1x128xf32> to vector<128x128xf32>
      %18 = arith.addf %16, %17 : vector<128x128xf32>
      %cst = arith.constant 2.000000e-01 : f32
      %19 = vector.broadcast %cst : f32 to vector<128x128xf32>
      %20 = arith.mulf %19, %18 : vector<128x128xf32>
      %21 = arith.maximumf %18, %20 : vector<128x128xf32>
      %cst_9 = arith.constant -1.000000e+30 : f32
      %22 = vector.broadcast %cst_9 : f32 to vector<128x128xf32>
      %23 = arith.select %13, %21, %22 : vector<128x128xi1>, vector<128x128xf32>
      %c0_10 = arith.constant 0 : index
      %c0_11 = arith.constant 0 : index
      %24 = vector.load %arg12[%c0_10, %c0_11] : memref<128x1xf32, #tpu.memory_space<vmem>>, vector<128x1xf32>
      %cst_12 = arith.constant dense<0xFF800000> : vector<128xf32>
      %25 = vector.multi_reduction <maximumf>, %23, %cst_12 [1] : vector<128x128xf32> to vector<128xf32>
      %26 = vector.shape_cast %25 : vector<128xf32> to vector<128x1xf32>
      %27 = arith.maximumf %24, %26 : vector<128x1xf32>
      %28 = arith.subf %24, %27 : vector<128x1xf32>
      %29 = math.exp %28 : vector<128x1xf32>
      %30 = vector.broadcast %27 : vector<128x1xf32> to vector<128x128xf32>
      %31 = arith.subf %23, %30 : vector<128x128xf32>
      %32 = math.exp %31 : vector<128x128xf32>
      %cst_13 = arith.constant 0.000000e+00 : f32
      %33 = vector.broadcast %cst_13 : f32 to vector<128x128xf32>
      %34 = arith.select %13, %32, %33 : vector<128x128xi1>, vector<128x128xf32>
      %35 = arith.index_cast %arg0 : i32 to index
      %36 = arith.index_cast %arg1 : i32 to index
      %37 = memref.load %arg2[%35, %36] : memref<1x1xi32, #tpu.memory_space<smem>>
      %c128_i32 = arith.constant 128 : i32
      %38 = arith.muli %37, %c128_i32 : i32
      %39 = tpu.assume_multiple %38, 128 : i32
      %40 = arith.index_cast %39 : i32 to index
      %c0_14 = arith.constant 0 : index
      %41 = vector.load %arg7[%40, %c0_14] : memref<128x128xbf16, #tpu.memory_space<vmem>>, vector<128x128xbf16>
      %c0_15 = arith.constant 0 : index
      %c0_16 = arith.constant 0 : index
      %42 = vector.load %arg12[%c0_15, %c0_16] : memref<128x1xf32, #tpu.memory_space<vmem>>, vector<128x1xf32>
      tpu.vector_store %arg12[%c0_15, %c0_16], %27 {strides = array<i32>} : memref<128x1xf32, #tpu.memory_space<vmem>>, vector<128x1xf32>,
      %c0_17 = arith.constant 0 : index
      %c0_18 = arith.constant 0 : index
      %43 = vector.load %arg13[%c0_17, %c0_18] : memref<128x1xf32, #tpu.memory_space<vmem>>, vector<128x1xf32>
      %44 = arith.mulf %29, %43 : vector<128x1xf32>
      %cst_19 = arith.constant dense<0.000000e+00> : vector<128xf32>
      %45 = vector.multi_reduction <add>, %34, %cst_19 [1] : vector<128x128xf32> to vector<128xf32>
      %46 = vector.shape_cast %45 : vector<128xf32> to vector<128x1xf32>
      %47 = arith.addf %44, %46 : vector<128x1xf32>
      %c0_20 = arith.constant 0 : index
      %c0_21 = arith.constant 0 : index
      %48 = vector.load %arg13[%c0_20, %c0_21] : memref<128x1xf32, #tpu.memory_space<vmem>>, vector<128x1xf32>
      tpu.vector_store %arg13[%c0_20, %c0_21], %47 {strides = array<i32>} : memref<128x1xf32, #tpu.memory_space<vmem>>, vector<128x1xf32>,
      %c0_22 = arith.constant 0 : index
      %c0_23 = arith.constant 0 : index
      %49 = vector.load %arg14[%c0_22, %c0_23] : memref<128x128xf32, #tpu.memory_space<vmem>>, vector<128x128xf32>
      %50 = vector.broadcast %29 : vector<128x1xf32> to vector<128x128xf32>
      %51 = arith.mulf %50, %49 : vector<128x128xf32>
      %52 = arith.truncf %34 : vector<128x128xf32> to vector<128x128xbf16>
      %cst_24 = arith.constant dense<0.000000e+00> : vector<128x128xf32>
      %53 = tpu.matmul %52, %41, %cst_24 {dimension_numbers = #tpu.dot_dimension_numbers<[1], [0], [0], [1], [0, 0, 1, 1], [], []>} : vector<128x128xbf16>, vector<128x128xbf16>, vector<128x128xf32> -> vector<128x128xf32>
      %54 = arith.addf %51, %53 : vector<128x128xf32>
      %c0_25 = arith.constant 0 : index
      %c0_26 = arith.constant 0 : index
      %55 = vector.load %arg14[%c0_25, %c0_26] : memref<128x128xf32, #tpu.memory_space<vmem>>, vector<128x128xf32>
      tpu.vector_store %arg14[%c0_25, %c0_26], %54 {strides = array<i32>} : memref<128x128xf32, #tpu.memory_space<vmem>>, vector<128x128xf32>,
    } else {
    }
    %c0_i32_2 = arith.constant 0 : i32
    %8 = arith.cmpi eq, %arg1, %c0_i32_2 : i32
    %9 = arith.extui %8 : i1 to i32
    %c0_i32_3 = arith.constant 0 : i32
    %10 = arith.cmpi ne, %9, %c0_i32_3 : i32
    scf.if %10 {
      %c0 = arith.constant 0 : index
      %c0_4 = arith.constant 0 : index
      %11 = vector.load %arg13[%c0, %c0_4] : memref<128x1xf32, #tpu.memory_space<vmem>>, vector<128x1xf32>
      %cst = arith.constant 0.000000e+00 : f32
      %12 = vector.broadcast %cst : f32 to vector<128x1xf32>
      %13 = arith.cmpf ogt, %11, %12 : vector<128x1xf32>
      %cst_5 = arith.constant 1.000000e+00 : f32
      %14 = vector.broadcast %cst_5 : f32 to vector<128x1xf32>
      %15 = arith.select %13, %11, %14 : vector<128x1xi1>, vector<128x1xf32>
      %16 = tpu.reciprocal %15 {approx = true} : vector<128x1xf32> -> vector<128x1xf32>
      %c0_6 = arith.constant 0 : index
      %c0_7 = arith.constant 0 : index
      %17 = vector.load %arg14[%c0_6, %c0_7] : memref<128x128xf32, #tpu.memory_space<vmem>>, vector<128x128xf32>
      %18 = vector.broadcast %16 : vector<128x1xf32> to vector<128x128xf32>
      %19 = arith.mulf %17, %18 : vector<128x128xf32>
      %c0_8 = arith.constant 0 : index
      %c0_9 = arith.constant 0 : index
      %20 = vector.load %arg8[%c0_8, %c0_9] : memref<1x128xf32, #tpu.memory_space<vmem>>, vector<1x128xf32>
      %21 = vector.broadcast %20 : vector<1x128xf32> to vector<128x128xf32>
      %22 = arith.addf %19, %21 : vector<128x128xf32>
      %23 = arith.truncf %22 : vector<128x128xf32> to vector<128x128xbf16>
      %c0_10 = arith.constant 0 : index
      %c0_11 = arith.constant 0 : index
      %24 = vector.load %arg9[%c0_10, %c0_11] : memref<128x128xbf16, #tpu.memory_space<vmem>>, vector<128x128xbf16>
      %cst_12 = arith.constant dense<0.000000e+00> : vector<128x128xf32>
      %25 = tpu.matmul %23, %24, %cst_12 {dimension_numbers = #tpu.dot_dimension_numbers<[1], [0], [0], [1], [0, 0, 1, 1], [], []>} : vector<128x128xbf16>, vector<128x128xbf16>, vector<128x128xf32> -> vector<128x128xf32>
      %c0_13 = arith.constant 0 : index
      %c0_14 = arith.constant 0 : index
      %26 = vector.load %arg10[%c0_13, %c0_14] : memref<1x128xf32, #tpu.memory_space<vmem>>, vector<1x128xf32>
      %27 = vector.broadcast %26 : vector<1x128xf32> to vector<128x128xf32>
      %28 = arith.addf %25, %27 : vector<128x128xf32>
      %c0_15 = arith.constant 0 : index
      %c0_16 = arith.constant 0 : index
      %29 = vector.load %arg11[%c0_15, %c0_16] : memref<128x128xf32, #tpu.memory_space<vmem>>, vector<128x128xf32>
      tpu.vector_store %arg11[%c0_15, %c0_16], %28 {strides = array<i32>} : memref<128x128xf32, #tpu.memory_space<vmem>>, vector<128x128xf32>,
    } else {
    }
    return
  }
  func.func @transform_0(%arg0: i32, %arg1: i32, %arg2: memref<1x1xi32, #tpu.memory_space<smem>>, %arg3: memref<1xi32, #tpu.memory_space<smem>>) -> (i32, i32) {
    %c0_i32 = arith.constant 0 : i32
    %c0_i32_0 = arith.constant 0 : i32
    return %arg0, %c0_i32 : i32, i32
  }
  func.func @transform_1(%arg0: i32, %arg1: i32, %arg2: memref<1x1xi32, #tpu.memory_space<smem>>, %arg3: memref<1xi32, #tpu.memory_space<smem>>) -> (i32, i32) {
    %0 = arith.index_cast %arg0 : i32 to index
    %1 = arith.index_cast %arg1 : i32 to index
    %2 = memref.load %arg2[%0, %1] : memref<1x1xi32, #tpu.memory_space<smem>>
    %c0_i32 = arith.constant 0 : i32
    %c0_i32_0 = arith.constant 0 : i32
    return %c0_i32, %2 : i32, i32
  }
  func.func @transform_2(%arg0: i32, %arg1: i32, %arg2: memref<1x1xi32, #tpu.memory_space<smem>>, %arg3: memref<1xi32, #tpu.memory_space<smem>>) -> (i32, i32) {
    %0 = arith.index_cast %arg0 : i32 to index
    %1 = arith.index_cast %arg1 : i32 to index
    %2 = memref.load %arg2[%0, %1] : memref<1x1xi32, #tpu.memory_space<smem>>
    %c0_i32 = arith.constant 0 : i32
    return %arg0, %2 : i32, i32
  }
  func.func @transform_3(%arg0: i32, %arg1: i32, %arg2: memref<1x1xi32, #tpu.memory_space<smem>>, %arg3: memref<1xi32, #tpu.memory_space<smem>>) -> (i32, i32) {
    %c0_i32 = arith.constant 0 : i32
    %c0_i32_0 = arith.constant 0 : i32
    %c0_i32_1 = arith.constant 0 : i32
    return %c0_i32, %c0_i32_0 : i32, i32
  }
  func.func @transform_4(%arg0: i32, %arg1: i32, %arg2: memref<1x1xi32, #tpu.memory_space<smem>>, %arg3: memref<1xi32, #tpu.memory_space<smem>>) -> (i32, i32) {
    %c0_i32 = arith.constant 0 : i32
    %c0_i32_0 = arith.constant 0 : i32
    %c0_i32_1 = arith.constant 0 : i32
    return %c0_i32, %c0_i32_0 : i32, i32
  }
  func.func @transform_5(%arg0: i32, %arg1: i32, %arg2: memref<1x1xi32, #tpu.memory_space<smem>>, %arg3: memref<1xi32, #tpu.memory_space<smem>>) -> (i32, i32) {
    %c0_i32 = arith.constant 0 : i32
    %c0_i32_0 = arith.constant 0 : i32
    %c0_i32_1 = arith.constant 0 : i32
    return %c0_i32, %c0_i32_0 : i32, i32
  }
  func.func @transform_6(%arg0: i32, %arg1: i32, %arg2: memref<1x1xi32, #tpu.memory_space<smem>>, %arg3: memref<1xi32, #tpu.memory_space<smem>>) -> (i32, i32) {
    %c0_i32 = arith.constant 0 : i32
    %c0_i32_0 = arith.constant 0 : i32
    %c0_i32_1 = arith.constant 0 : i32
    return %c0_i32, %c0_i32_0 : i32, i32
  }
  func.func @transform_7(%arg0: i32, %arg1: i32, %arg2: memref<1x1xi32, #tpu.memory_space<smem>>, %arg3: memref<1xi32, #tpu.memory_space<smem>>) -> (i32, i32) {
    %c0_i32 = arith.constant 0 : i32
    %c0_i32_0 = arith.constant 0 : i32
    return %arg0, %c0_i32 : i32, i32
  }
}

</mosaic_0001>

<llo_original>
// kernel: hetero_gat_forward.5
$region0: #{hetero_gat_forward.5}
  #allocation0 [shape = 'u32[]', space=smem, size = 0x4, offset = 0x4, fixed_abs, tag = 'smem constant byte address 0x4 - core index']
  #allocation1 [shape = 'u32[144,128]{1,0:T(1,128)}', space=vmem, size = 0x12000, scoped, tag = 'internal scratch']
  %s0 = inlined_call_operand.vmem [shape: bf16[128,128], index: 0, kind: input, shape index: {}]
  %s1 = inlined_call_operand.vmem [shape: bf16[128,128], index: 1, kind: input, shape index: {}]
  %s2 = inlined_call_operand.vmem [shape: bf16[128,128], index: 2, kind: output, shape index: {}]
  %s3 = sld [smem:[#allocation0]]
  $region18: #{hetero_gat_forward.5} parent=0
    _
  %s5 = ssub.s32 1, %s3
  %s6 = scalar_select 0, %s5, %s3
  // Predicated region
  $region2: #{hetero_gat_forward.5} parent=0 // pred_check
    _
  $region3: #{hetero_gat_forward.5} parent=0 // pred_check_branch
    %8 = sbr.rel (0) target = $region5
  $region4: #{hetero_gat_forward.5} parent=0 // pred_region
    _
  $region5: #{hetero_gat_forward.5} parent=0 // pred_fallthru
    _
  // Predicated region
  $region6: #{hetero_gat_forward.5} parent=0 // pred_check
    _
  $region7: #{hetero_gat_forward.5} parent=0 // pred_check_branch
    %10 = sbr.rel (0) target = $region9
  $region8: #{hetero_gat_forward.5} parent=0 // pred_region
    _
  $region9: #{hetero_gat_forward.5} parent=0 // pred_fallthru
    _
  %v12 = vld [vmem:[%s0] sm:$0xf]
  %v13 = vld [vmem:[%s0 + $0x4] sm:$0xf]
  %v14 = vld [vmem:[%s0 + $0x8] sm:$0xf]
  %v15 = vld [vmem:[%s0 + $0xc] sm:$0xf]
  %v16 = vld [vmem:[%s0 + $0x10] sm:$0xf]
  %v17 = vld [vmem:[%s0 + $0x14] sm:$0xf]
  %v18 = vld [vmem:[%s0 + $0x18] sm:$0xf]
  %v19 = vld [vmem:[%s0 + $0x1c] sm:$0xf]
  %v20 = vld [vmem:[%s0 + $0x20] sm:$0xf]
  %v21 = vld [vmem:[%s0 + $0x24] sm:$0xf]
  %v22 = vld [vmem:[%s0 + $0x28] sm:$0xf]
  %v23 = vld [vmem:[%s0 + $0x2c] sm:$0xf]
  %v24 = vld [vmem:[%s0 + $0x30] sm:$0xf]
  %v25 = vld [vmem:[%s0 + $0x34] sm:$0xf]
  %v26 = vld [vmem:[%s0 + $0x38] sm:$0xf]
  %v27 = vld [vmem:[%s0 + $0x3c] sm:$0xf]
  %v28 = vld [vmem:[%s1] sm:$0xf]
  %v29 = vld [vmem:[%s1 + $0x4] sm:$0xf]
  %v30 = vld [vmem:[%s1 + $0x8] sm:$0xf]
  %v31 = vld [vmem:[%s1 + $0xc] sm:$0xf]
  %v32 = vld [vmem:[%s1 + $0x10] sm:$0xf]
  %v33 = vld [vmem:[%s1 + $0x14] sm:$0xf]
  %v34 = vld [vmem:[%s1 + $0x18] sm:$0xf]
  %v35 = vld [vmem:[%s1 + $0x1c] sm:$0xf]
  %v36 = vld [vmem:[%s1 + $0x20] sm:$0xf]
  %v37 = vld [vmem:[%s1 + $0x24] sm:$0xf]
  %v38 = vld [vmem:[%s1 + $0x28] sm:$0xf]
  %v39 = vld [vmem:[%s1 + $0x2c] sm:$0xf]
  %v40 = vld [vmem:[%s1 + $0x30] sm:$0xf]
  %v41 = vld [vmem:[%s1 + $0x34] sm:$0xf]
  %v42 = vld [vmem:[%s1 + $0x38] sm:$0xf]
  %v43 = vld [vmem:[%s1 + $0x3c] sm:$0xf]
  %v60 = vunpack.c.l.b16 %v12
  %v61 = vunpack.c.l.b16 %v13
  %v62 = vunpack.c.l.b16 %v14
  %v63 = vunpack.c.l.b16 %v15
  %v64 = vunpack.c.l.b16 %v16
  %v65 = vunpack.c.l.b16 %v17
  %v66 = vunpack.c.l.b16 %v18
  %v67 = vunpack.c.l.b16 %v19
  %v68 = vunpack.c.l.b16 %v20
  %v69 = vunpack.c.l.b16 %v21
  %v70 = vunpack.c.l.b16 %v22
  %v71 = vunpack.c.l.b16 %v23
  %v72 = vunpack.c.l.b16 %v24
  %v73 = vunpack.c.l.b16 %v25
  %v74 = vunpack.c.l.b16 %v26
  %v75 = vunpack.c.l.b16 %v27
  %v76 = vpack.c.b16 %v61, %v60
  %v77 = vpack.c.b16 %v63, %v62
  %v78 = vpack.c.b16 %v65, %v64
  %v79 = vpack.c.b16 %v67, %v66
  %v80 = vpack.c.b16 %v69, %v68
  %v81 = vpack.c.b16 %v71, %v70
  %v82 = vpack.c.b16 %v73, %v72
  %v83 = vpack.c.b16 %v75, %v74
  %v108 = vunpack.c.l.b16 %v28
  %v109 = vunpack.c.l.b16 %v29
  %v110 = vunpack.c.l.b16 %v30
  %v111 = vunpack.c.l.b16 %v31
  %v112 = vunpack.c.l.b16 %v32
  %v113 = vunpack.c.l.b16 %v33
  %v114 = vunpack.c.l.b16 %v34
  %v115 = vunpack.c.l.b16 %v35
  %v116 = vunpack.c.l.b16 %v36
  %v117 = vunpack.c.l.b16 %v37
  %v118 = vunpack.c.l.b16 %v38
  %v119 = vunpack.c.l.b16 %v39
  %v120 = vunpack.c.l.b16 %v40
  %v121 = vunpack.c.l.b16 %v41
  %v122 = vunpack.c.l.b16 %v42
  %v123 = vunpack.c.l.b16 %v43
  %v124 = vpack.c.b16 %v109, %v108
  %v125 = vpack.c.b16 %v111, %v110
  %v126 = vpack.c.b16 %v113, %v112
  %v127 = vpack.c.b16 %v115, %v114
  %v128 = vpack.c.b16 %v117, %v116
  %v129 = vpack.c.b16 %v119, %v118
  %v130 = vpack.c.b16 %v121, %v120
  %v131 = vpack.c.b16 %v123, %v122
  %140 = vmatprep.subr.bf16.mxu0 0
  %141 = vmatpush1.bf16.msra.mxu0 %v131
  %142 = vmatprep.subr.bf16.mxu0 0
  %143 = vmatpush1.bf16.msra.mxu0 %v130
  %144 = vmatprep.subr.bf16.mxu0 0
  %145 = vmatpush1.bf16.msra.mxu0 %v129
  %146 = vmatprep.subr.bf16.mxu0 0
  %147 = vmatpush1.bf16.msra.mxu0 %v128
  %148 = vmatprep.subr.bf16.mxu0 0
  %149 = vmatpush1.bf16.msra.mxu0 %v127
  %150 = vmatprep.subr.bf16.mxu0 0
  %151 = vmatpush1.bf16.msra.mxu0 %v126
  %152 = vmatprep.subr.bf16.mxu0 0
  %153 = vmatpush1.bf16.msra.mxu0 %v125
  %154 = vmatprep.subr.bf16.mxu0 0
  %155 = vmatpush1.bf16.msra.mxu0 %v124
  %156 = vmatprep.subr.bf16.mxu0 0
  %157 = vmatpush2.bf16.msra.mxu0 0
  %158 = vmatprep.subr.bf16.mxu0 0
  %159 = vmatpush2.bf16.msra.mxu0 0
  %160 = vmatprep.subr.bf16.mxu0 0
  %161 = vmatpush2.bf16.msra.mxu0 0
  %162 = vmatprep.subr.bf16.mxu0 0
  %163 = vmatpush2.bf16.msra.mxu0 0
  %164 = vmatprep.subr.bf16.mxu0 0
  %165 = vmatpush2.bf16.msra.mxu0 0
  %166 = vmatprep.subr.bf16.mxu0 0
  %167 = vmatpush2.bf16.msra.mxu0 0
  %168 = vmatprep.subr.bf16.mxu0 0
  %169 = vmatpush2.bf16.msra.mxu0 0
  %170 = vmatprep.subr.bf16.mxu0 0
  %171 = vmatpush2.bf16.msra.mxu0 0
  %172 = vmatprep.mubr.bf16.mxu0 0
  %173 = vmatmul.mubr.bf16.gmra.mxu0 %v76
  %v174 = vpop.f32.mrf.mxu0
  %v175 = vadd.f32 0.0, %v174
  %v176 = vpop.f32.mrf.mxu0
  %v177 = vpop.f32.mrf.mxu0
  %v178 = vadd.f32 0.0, %v177
  %v179 = vpop.f32.mrf.mxu0
  %180 = vmatprep.mubr.bf16.mxu0 0
  %181 = vmatmul.mubr.bf16.gmra.mxu0 %v77
  %v182 = vpop.f32.mrf.mxu0
  %v183 = vadd.f32 0.0, %v182
  %v184 = vpop.f32.mrf.mxu0
  %v185 = vpop.f32.mrf.mxu0
  %v186 = vadd.f32 0.0, %v185
  %v187 = vpop.f32.mrf.mxu0
  %188 = vmatprep.mubr.bf16.mxu0 0
  %189 = vmatmul.mubr.bf16.gmra.mxu0 %v78
  %v190 = vpop.f32.mrf.mxu0
  %v191 = vadd.f32 0.0, %v190
  %v192 = vpop.f32.mrf.mxu0
  %v193 = vpop.f32.mrf.mxu0
  %v194 = vadd.f32 0.0, %v193
  %v195 = vpop.f32.mrf.mxu0
  %196 = vmatprep.mubr.bf16.mxu0 0
  %197 = vmatmul.mubr.bf16.gmra.mxu0 %v79
  %v198 = vpop.f32.mrf.mxu0
  %v199 = vadd.f32 0.0, %v198
  %v200 = vpop.f32.mrf.mxu0
  %v201 = vpop.f32.mrf.mxu0
  %v202 = vadd.f32 0.0, %v201
  %v203 = vpop.f32.mrf.mxu0
  %204 = vmatprep.mubr.bf16.mxu0 0
  %205 = vmatmul.mubr.bf16.gmra.mxu0 %v80
  %v206 = vpop.f32.mrf.mxu0
  %v207 = vadd.f32 0.0, %v206
  %v208 = vpop.f32.mrf.mxu0
  %v209 = vpop.f32.mrf.mxu0
  %v210 = vadd.f32 0.0, %v209
  %v211 = vpop.f32.mrf.mxu0
  %212 = vmatprep.mubr.bf16.mxu0 0
  %213 = vmatmul.mubr.bf16.gmra.mxu0 %v81
  %v214 = vpop.f32.mrf.mxu0
  %v215 = vadd.f32 0.0, %v214
  %v216 = vpop.f32.mrf.mxu0
  %v217 = vpop.f32.mrf.mxu0
  %v218 = vadd.f32 0.0, %v217
  %v219 = vpop.f32.mrf.mxu0
  %220 = vmatprep.mubr.bf16.mxu0 0
  %221 = vmatmul.mubr.bf16.gmra.mxu0 %v82
  %v222 = vpop.f32.mrf.mxu0
  %v223 = vadd.f32 0.0, %v222
  %v224 = vpop.f32.mrf.mxu0
  %v225 = vpop.f32.mrf.mxu0
  %v226 = vadd.f32 0.0, %v225
  %v227 = vpop.f32.mrf.mxu0
  %228 = vmatprep.mubr.bf16.mxu0 0
  %229 = vmatmul.mubr.bf16.gmra.mxu0 %v83
  %v230 = vpop.f32.mrf.mxu0
  %v231 = vadd.f32 0.0, %v230
  %v232 = vpop.f32.mrf.mxu0
  %v233 = vpop.f32.mrf.mxu0
  %v234 = vadd.f32 0.0, %v233
  %v235 = vpop.f32.mrf.mxu0
  %236 = vdwg.mxu0
  %v237 = vpack.c.bf16 %v178, %v175
  %v238 = vpack.c.bf16 %v186, %v183
  %v239 = vpack.c.bf16 %v194, %v191
  %v240 = vpack.c.bf16 %v202, %v199
  %v241 = vpack.c.bf16 %v210, %v207
  %v242 = vpack.c.bf16 %v218, %v215
  %v243 = vpack.c.bf16 %v226, %v223
  %v244 = vpack.c.bf16 %v234, %v231
  %v253 = vunpack.c.l.b16 %v237
  %v254 = vunpack.c.h.b16 %v237
  %v255 = vunpack.c.l.b16 %v238
  %v256 = vunpack.c.h.b16 %v238
  %v257 = vunpack.c.l.b16 %v239
  %v258 = vunpack.c.h.b16 %v239
  %v259 = vunpack.c.l.b16 %v240
  %v260 = vunpack.c.h.b16 %v240
  %v261 = vunpack.c.l.b16 %v241
  %v262 = vunpack.c.h.b16 %v241
  %v263 = vunpack.c.l.b16 %v242
  %v264 = vunpack.c.h.b16 %v242
  %v265 = vunpack.c.l.b16 %v243
  %v266 = vunpack.c.h.b16 %v243
  %v267 = vunpack.c.l.b16 %v244
  %v268 = vunpack.c.h.b16 %v244
  %v269 = vpack.c.b16 %v253, %v253
  %v270 = vpack.c.b16 %v254, %v254
  %v271 = vpack.c.b16 %v255, %v255
  %v272 = vpack.c.b16 %v256, %v256
  %v273 = vpack.c.b16 %v257, %v257
  %v274 = vpack.c.b16 %v258, %v258
  %v275 = vpack.c.b16 %v259, %v259
  %v276 = vpack.c.b16 %v260, %v260
  %v277 = vpack.c.b16 %v261, %v261
  %v278 = vpack.c.b16 %v262, %v262
  %v279 = vpack.c.b16 %v263, %v263
  %v280 = vpack.c.b16 %v264, %v264
  %v281 = vpack.c.b16 %v265, %v265
  %v282 = vpack.c.b16 %v266, %v266
  %v283 = vpack.c.b16 %v267, %v267
  %v284 = vpack.c.b16 %v268, %v268
  %301 = vst [vmem:[%s2] sm:$0xf] %v269
  %302 = vst [vmem:[%s2 + $0x4] sm:$0xf] %v270
  %303 = vst [vmem:[%s2 + $0x8] sm:$0xf] %v271
  %304 = vst [vmem:[%s2 + $0xc] sm:$0xf] %v272
  %305 = vst [vmem:[%s2 + $0x10] sm:$0xf] %v273
  %306 = vst [vmem:[%s2 + $0x14] sm:$0xf] %v274
  %307 = vst [vmem:[%s2 + $0x18] sm:$0xf] %v275
  %308 = vst [vmem:[%s2 + $0x1c] sm:$0xf] %v276
  %309 = vst [vmem:[%s2 + $0x20] sm:$0xf] %v277
  %310 = vst [vmem:[%s2 + $0x24] sm:$0xf] %v278
  %311 = vst [vmem:[%s2 + $0x28] sm:$0xf] %v279
  %312 = vst [vmem:[%s2 + $0x2c] sm:$0xf] %v280
  %313 = vst [vmem:[%s2 + $0x30] sm:$0xf] %v281
  %314 = vst [vmem:[%s2 + $0x34] sm:$0xf] %v282
  %315 = vst [vmem:[%s2 + $0x38] sm:$0xf] %v283
  %316 = vst [vmem:[%s2 + $0x3c] sm:$0xf] %v284
  // Predicated region
  $region10: #{hetero_gat_forward.5} parent=0 // pred_check
    _
  $region11: #{hetero_gat_forward.5} parent=0 // pred_check_branch
    %318 = sbr.rel (0) target = $region13
  $region12: #{hetero_gat_forward.5} parent=0 // pred_region
    _
  $region13: #{hetero_gat_forward.5} parent=0 // pred_fallthru
    _
  // Predicated region
  $region14: #{hetero_gat_forward.5} parent=0 // pred_check
    _
  $region15: #{hetero_gat_forward.5} parent=0 // pred_check_branch
    %320 = sbr.rel (0) target = $region17
  $region16: #{hetero_gat_forward.5} parent=0 // pred_region
    _
  $region17: #{hetero_gat_forward.5} parent=0 // pred_fallthru
    _

// kernel: hetero_gat_forward.6
$region0: #{hetero_gat_forward.6}
  #allocation0 [shape = 'u32[]', space=smem, size = 0x4, offset = 0x4, fixed_abs, tag = 'smem constant byte address 0x4 - core index']
  #allocation1 [shape = 'u32[144,128]{1,0:T(1,128)}', space=vmem, size = 0x12000, scoped, tag = 'internal scratch']
  #allocation2 [shape = 'f32[128,1]{1,0:T(8,128)}', space=vmem, size = 0x10000, scoped, tag = 'scratch operand']
  #allocation3 [shape = 'f32[128,1]{1,0:T(8,128)}', space=vmem, size = 0x10000, scoped, tag = 'scratch operand']
  #allocation4 [shape = 'f32[128,128]{1,0:T(8,128)}', space=vmem, size = 0x10000, scoped, tag = 'scratch operand']
  #allocation5 [shape = 's32[1]{0}', space=sflag, size = 0x4, scoped, tag = 'scoped memory for hetero_gat_forward.6']
  #allocation6 [shape = 's32[1,1]{1,0:T(1,128)S(6)}', space=smem, size = 0x200, scoped, tag = 'prefetched SMEM operand 0']
  #allocation7 [shape = 's32[1]{0:T(128)S(6)}', space=smem, size = 0x200, scoped, tag = 'prefetched SMEM operand 1']
  %s0 = inlined_call_operand.<no memory space> [shape: s32[1,1], index: 0, kind: input, shape index: {}]
  %s1 = inlined_call_operand.<no memory space> [shape: s32[1], index: 1, kind: input, shape index: {}]
  %s2 = inlined_call_operand.vmem [shape: f32[128,1], index: 2, kind: input, shape index: {}]
  %s3 = inlined_call_operand.vmem [shape: f32[1,128], index: 3, kind: input, shape index: {}]
  %s4 = inlined_call_operand.vmem [shape: s8[128,128], index: 4, kind: input, shape index: {}]
  %s5 = inlined_call_operand.vmem [shape: bf16[128,128], index: 5, kind: input, shape index: {}]
  %s6 = inlined_call_operand.vmem [shape: f32[1,128], index: 6, kind: input, shape index: {}]
  %s7 = inlined_call_operand.vmem [shape: bf16[128,128], index: 7, kind: input, shape index: {}]
  %s8 = inlined_call_operand.vmem [shape: f32[1,128], index: 8, kind: input, shape index: {}]
  %s9 = inlined_call_operand.vmem [shape: f32[128,128], index: 9, kind: output, shape index: {}]
  %s10 = sld [smem:[#allocation0]]
  $region50: #{hetero_gat_forward.6} parent=0
    _
  %s12 = ssub.s32 1, %s10
  %s13 = scalar_select 0, %s12, %s10
  %14 = sst [smem:[#allocation6]] %s0
  %15 = sst [smem:[#allocation7]] %s1
  // Predicated region
  $region2: #{hetero_gat_forward.6} parent=0 // pred_check
    _
  $region3: #{hetero_gat_forward.6} parent=0 // pred_check_branch
    %17 = sbr.rel (0) target = $region5
  $region4: #{hetero_gat_forward.6} parent=0 // pred_region
    _
  $region5: #{hetero_gat_forward.6} parent=0 // pred_fallthru
    _
  // Predicated region
  $region6: #{hetero_gat_forward.6} parent=0 // pred_check
    _
  $region7: #{hetero_gat_forward.6} parent=0 // pred_check_branch
    %19 = sbr.rel (0) target = $region9
  $region8: #{hetero_gat_forward.6} parent=0 // pred_region
    %s20 = sadd.s32 0, 0
    %s21 = smul.u32 %s20, 128
    %s22 = sadd.s32 %s21, 0
    %s23 = sld [smem:[#allocation6 + %s22]]
    %p24 = scmp.lt.s32.totalorder %s23, 0
    %s25 = scalar_select %p24, %s23, 0
    %s26 = scalar_lea.vmem %s3, %s25
    %s27 = sadd.s32 0, 0
    %s28 = smul.u32 %s27, 128
    %s29 = sadd.s32 %s28, 0
    %s30 = sld [smem:[#allocation6 + %s29]]
  $region9: #{hetero_gat_forward.6} parent=0 // pred_fallthru
    _
  // Predicated region
  $region10: #{hetero_gat_forward.6} parent=0 // pred_check
    _
  $region11: #{hetero_gat_forward.6} parent=0 // pred_check_branch
    %32 = sbr.rel (0) target = $region13
  $region12: #{hetero_gat_forward.6} parent=0 // pred_region
    %s33 = sadd.s32 0, 0
    %s34 = smul.u32 %s33, 128
    %s35 = sadd.s32 %s34, 0
    %s36 = sld [smem:[#allocation6 + %s35]]
    %p37 = scmp.lt.s32.totalorder %s36, 0
    %s38 = scalar_select %p37, %s36, 0
    %s39 = smul.addr %s38, 8
    %s40 = scalar_lea.vmem %s4, %s39
    %s41 = sadd.s32 0, 0
    %s42 = smul.u32 %s41, 128
    %s43 = sadd.s32 %s42, 0
    %s44 = sld [smem:[#allocation6 + %s43]]
  $region13: #{hetero_gat_forward.6} parent=0 // pred_fallthru
    _
  // Predicated region
  $region14: #{hetero_gat_forward.6} parent=0 // pred_check
    _
  $region15: #{hetero_gat_forward.6} parent=0 // pred_check_branch
    %46 = sbr.rel (0) target = $region17
  $region16: #{hetero_gat_forward.6} parent=0 // pred_region
    _
  $region17: #{hetero_gat_forward.6} parent=0 // pred_fallthru
    _
  // Predicated region
  $region18: #{hetero_gat_forward.6} parent=0 // pred_check
    _
  $region19: #{hetero_gat_forward.6} parent=0 // pred_check_branch
    %48 = sbr.rel (0) target = $region21
  $region20: #{hetero_gat_forward.6} parent=0 // pred_region
    _
  $region21: #{hetero_gat_forward.6} parent=0 // pred_fallthru
    _
  // Predicated region
  $region22: #{hetero_gat_forward.6} parent=0 // pred_check
    _
  $region23: #{hetero_gat_forward.6} parent=0 // pred_check_branch
    %50 = sbr.rel (0) target = $region25
  $region24: #{hetero_gat_forward.6} parent=0 // pred_region
    _
  $region25: #{hetero_gat_forward.6} parent=0 // pred_fallthru
    _
  // Predicated region
  $region26: #{hetero_gat_forward.6} parent=0 // pred_check
    _
  $region27: #{hetero_gat_forward.6} parent=0 // pred_check_branch
    %52 = sbr.rel (0) target = $region29
  $region28: #{hetero_gat_forward.6} parent=0 // pred_region
    _
  $region29: #{hetero_gat_forward.6} parent=0 // pred_fallthru
    _
  %s53 = sadd.s32 0, 0
  %s54 = smul.u32 %s53, 128
  %s55 = sadd.s32 %s54, 0
  %s56 = sld [smem:[#allocation6 + %s55]]
  %p57 = scmp.lt.s32.totalorder %s56, 0
  %s58 = scalar_select %p57, %s56, 0
  %s59 = scalar_lea.vmem %s3, %s58
  %s60 = sadd.s32 0, 0
  %s61 = smul.u32 %s60, 128
  %s62 = sadd.s32 %s61, 0
  %s63 = sld [smem:[#allocation6 + %s62]]
  %p64 = scmp.lt.s32.totalorder %s63, 0
  %s65 = scalar_select %p64, %s63, 0
  %s66 = smul.addr %s65, 8
  %s67 = scalar_lea.vmem %s4, %s66
  %s68 = sadd.s32 0, 0
  %s69 = smul.u32 %s68, 128
  %s70 = sadd.s32 %s69, 0
  %s71 = sld [smem:[#allocation6 + %s70]]
  %p72 = scmp.lt.s32.totalorder %s71, 0
  %s73 = scalar_select %p72, %s71, 0
  %s74 = scalar_lea.vmem %s3, %s73
  %s75 = sadd.s32 0, 0
  %s76 = smul.u32 %s75, 128
  %s77 = sadd.s32 %s76, 0
  %s78 = sld [smem:[#allocation6 + %s77]]
  %s79 = sadd.s32 0, 0
  %s80 = smul.u32 %s79, 128
  %s81 = sadd.s32 %s80, 0
  %s82 = sld [smem:[#allocation6 + %s81]]
  %p83 = scmp.lt.s32.totalorder %s82, 0
  %s84 = scalar_select %p83, %s82, 0
  %s85 = smul.addr %s84, 8
  %s86 = scalar_lea.vmem %s4, %s85
  %s87 = sadd.s32 0, 0
  %s88 = smul.u32 %s87, 128
  %s89 = sadd.s32 %s88, 0
  %s90 = sld [smem:[#allocation6 + %s89]]
  %p94 = scmp.eq.s32.totalorder 0, 0
  // Predicated region
  $region30: #{hetero_gat_forward.6} parent=0 // pred_check
    %p95 = pneg %p94
  $region31: #{hetero_gat_forward.6} parent=0 // pred_check_branch
    %97 = sbr.rel (%p95) target = $region33
  $region32: #{hetero_gat_forward.6} parent=0 // pred_region
    %vm98 = vcmask 7168
    %99 = vst.msk [vmem:[#allocation2] sm:$0xff] %vm98, -1e+30
    %100 = vst.msk [vmem:[#allocation2 + $0x8] sm:$0xff] %vm98, -1e+30
    %101 = vst.msk [vmem:[#allocation2 + $0x10] sm:$0xff] %vm98, -1e+30
    %102 = vst.msk [vmem:[#allocation2 + $0x18] sm:$0xff] %vm98, -1e+30
    %103 = vst.msk [vmem:[#allocation2 + $0x20] sm:$0xff] %vm98, -1e+30
    %104 = vst.msk [vmem:[#allocation2 + $0x28] sm:$0xff] %vm98, -1e+30
    %105 = vst.msk [vmem:[#allocation2 + $0x30] sm:$0xff] %vm98, -1e+30
    %106 = vst.msk [vmem:[#allocation2 + $0x38] sm:$0xff] %vm98, -1e+30
    %107 = vst.msk [vmem:[#allocation2 + $0x40] sm:$0xff] %vm98, -1e+30
    %108 = vst.msk [vmem:[#allocation2 + $0x48] sm:$0xff] %vm98, -1e+30
    %109 = vst.msk [vmem:[#allocation2 + $0x50] sm:$0xff] %vm98, -1e+30
    %110 = vst.msk [vmem:[#allocation2 + $0x58] sm:$0xff] %vm98, -1e+30
    %111 = vst.msk [vmem:[#allocation2 + $0x60] sm:$0xff] %vm98, -1e+30
    %112 = vst.msk [vmem:[#allocation2 + $0x68] sm:$0xff] %vm98, -1e+30
    %113 = vst.msk [vmem:[#allocation2 + $0x70] sm:$0xff] %vm98, -1e+30
    %114 = vst.msk [vmem:[#allocation2 + $0x78] sm:$0xff] %vm98, -1e+30
    %115 = vst.msk [vmem:[#allocation3] sm:$0xff] %vm98, 0.0
    %116 = vst.msk [vmem:[#allocation3 + $0x8] sm:$0xff] %vm98, 0.0
    %117 = vst.msk [vmem:[#allocation3 + $0x10] sm:$0xff] %vm98, 0.0
    %118 = vst.msk [vmem:[#allocation3 + $0x18] sm:$0xff] %vm98, 0.0
    %119 = vst.msk [vmem:[#allocation3 + $0x20] sm:$0xff] %vm98, 0.0
    %120 = vst.msk [vmem:[#allocation3 + $0x28] sm:$0xff] %vm98, 0.0
    %121 = vst.msk [vmem:[#allocation3 + $0x30] sm:$0xff] %vm98, 0.0
    %122 = vst.msk [vmem:[#allocation3 + $0x38] sm:$0xff] %vm98, 0.0
    %123 = vst.msk [vmem:[#allocation3 + $0x40] sm:$0xff] %vm98, 0.0
    %124 = vst.msk [vmem:[#allocation3 + $0x48] sm:$0xff] %vm98, 0.0
    %125 = vst.msk [vmem:[#allocation3 + $0x50] sm:$0xff] %vm98, 0.0
    %126 = vst.msk [vmem:[#allocation3 + $0x58] sm:$0xff] %vm98, 0.0
    %127 = vst.msk [vmem:[#allocation3 + $0x60] sm:$0xff] %vm98, 0.0
    %128 = vst.msk [vmem:[#allocation3 + $0x68] sm:$0xff] %vm98, 0.0
    %129 = vst.msk [vmem:[#allocation3 + $0x70] sm:$0xff] %vm98, 0.0
    %130 = vst.msk [vmem:[#allocation3 + $0x78] sm:$0xff] %vm98, 0.0
    %131 = vst [vmem:[#allocation4] sm:$0xff] 0.0
    %132 = vst [vmem:[#allocation4 + $0x8] sm:$0xff] 0.0
    %133 = vst [vmem:[#allocation4 + $0x10] sm:$0xff] 0.0
    %134 = vst [vmem:[#allocation4 + $0x18] sm:$0xff] 0.0
    %135 = vst [vmem:[#allocation4 + $0x20] sm:$0xff] 0.0
    %136 = vst [vmem:[#allocation4 + $0x28] sm:$0xff] 0.0
    %137 = vst [vmem:[#allocation4 + $0x30] sm:$0xff] 0.0
    %138 = vst [vmem:[#allocation4 + $0x38] sm:$0xff] 0.0
    %139 = vst [vmem:[#allocation4 + $0x40] sm:$0xff] 0.0
    %140 = vst [vmem:[#allocation4 + $0x48] sm:$0xff] 0.0
    %141 = vst [vmem:[#allocation4 + $0x50] sm:$0xff] 0.0
    %142 = vst [vmem:[#allocation4 + $0x58] sm:$0xff] 0.0
    %143 = vst [vmem:[#allocation4 + $0x60] sm:$0xff] 0.0
    %144 = vst [vmem:[#allocation4 + $0x68] sm:$0xff] 0.0
    %145 = vst [vmem:[#allocation4 + $0x70] sm:$0xff] 0.0
    %146 = vst [vmem:[#allocation4 + $0x78] sm:$0xff] 0.0
  $region33: #{hetero_gat_forward.6} parent=0 // pred_fallthru
    _
  %s147 = sld [smem:[#allocation7]]
  %p148 = scmp.lt.s32.totalorder 0, %s147
  // Predicated region
  $region34: #{hetero_gat_forward.6} parent=0 // pred_check
    %p149 = pneg %p148
  $region35: #{hetero_gat_forward.6} parent=0 // pred_check_branch
    %151 = sbr.rel (%p149) target = $region37
  $region36: #{hetero_gat_forward.6} parent=0 // pred_region
    %v152 = vld [vmem:[%s86] sm:$0xff]
    %v153 = vld [vmem:[%s86 + $0x8] sm:$0xff]
    %v154 = vld [vmem:[%s86 + $0x10] sm:$0xff]
    %v155 = vld [vmem:[%s86 + $0x18] sm:$0xff]
    %vm156 = vnez %v152
    %vm157 = vnez %v153
    %vm158 = vnez %v154
    %vm159 = vnez %v155
    %v160 = vld [vmem:[%s2] sm:$0xff]
    %v161 = vld [vmem:[%s2 + $0x8] sm:$0xff]
    %v162 = vld [vmem:[%s2 + $0x10] sm:$0xff]
    %v163 = vld [vmem:[%s2 + $0x18] sm:$0xff]
    %v164 = vld [vmem:[%s2 + $0x20] sm:$0xff]
    %v165 = vld [vmem:[%s2 + $0x28] sm:$0xff]
    %v166 = vld [vmem:[%s2 + $0x30] sm:$0xff]
    %v167 = vld [vmem:[%s2 + $0x38] sm:$0xff]
    %v168 = vld [vmem:[%s2 + $0x40] sm:$0xff]
    %v169 = vld [vmem:[%s2 + $0x48] sm:$0xff]
    %v170 = vld [vmem:[%s2 + $0x50] sm:$0xff]
    %v171 = vld [vmem:[%s2 + $0x58] sm:$0xff]
    %v172 = vld [vmem:[%s2 + $0x60] sm:$0xff]
    %v173 = vld [vmem:[%s2 + $0x68] sm:$0xff]
    %v174 = vld [vmem:[%s2 + $0x70] sm:$0xff]
    %v175 = vld [vmem:[%s2 + $0x78] sm:$0xff]
    %v176 = vld [vmem:[%s74] sm:$0x1]
    %178 = vset.pattern.permute.xlu0 0
    %179 = vperm.xlu0 %178, %v160
    %v180 = vpop.permute.xlu0 %179
    %183 = vset.pattern.permute.xlu0 0
    %184 = vperm.xlu0 %183, %v161
    %v185 = vpop.permute.xlu0 %184
    %188 = vset.pattern.permute.xlu0 0
    %189 = vperm.xlu0 %188, %v162
    %v190 = vpop.permute.xlu0 %189
    %193 = vset.pattern.permute.xlu0 0
    %194 = vperm.xlu0 %193, %v163
    %v195 = vpop.permute.xlu0 %194
    %198 = vset.pattern.permute.xlu0 0
    %199 = vperm.xlu0 %198, %v164
    %v200 = vpop.permute.xlu0 %199
    %203 = vset.pattern.permute.xlu0 0
    %204 = vperm.xlu0 %203, %v165
    %v205 = vpop.permute.xlu0 %204
    %208 = vset.pattern.permute.xlu0 0
    %209 = vperm.xlu0 %208, %v166
    %v210 = vpop.permute.xlu0 %209
    %213 = vset.pattern.permute.xlu0 0
    %214 = vperm.xlu0 %213, %v167
    %v215 = vpop.permute.xlu0 %214
    %218 = vset.pattern.permute.xlu0 0
    %219 = vperm.xlu0 %218, %v168
    %v220 = vpop.permute.xlu0 %219
    %223 = vset.pattern.permute.xlu0 0
    %224 = vperm.xlu0 %223, %v169
    %v225 = vpop.permute.xlu0 %224
    %228 = vset.pattern.permute.xlu0 0
    %229 = vperm.xlu0 %228, %v170
    %v230 = vpop.permute.xlu0 %229
    %233 = vset.pattern.permute.xlu0 0
    %234 = vperm.xlu0 %233, %v171
    %v235 = vpop.permute.xlu0 %234
    %238 = vset.pattern.permute.xlu0 0
    %239 = vperm.xlu0 %238, %v172
    %v240 = vpop.permute.xlu0 %239
    %243 = vset.pattern.permute.xlu0 0
    %244 = vperm.xlu0 %243, %v173
    %v245 = vpop.permute.xlu0 %244
    %248 = vset.pattern.permute.xlu0 0
    %249 = vperm.xlu0 %248, %v174
    %v250 = vpop.permute.xlu0 %249
    %253 = vset.pattern.permute.xlu0 0
    %254 = vperm.xlu0 %253, %v175
    %v255 = vpop.permute.xlu0 %254
    %v258 = vlaneseq
    %v259 = vshrl.u32 %v258, 7
    %v260 = vsub.s32 0, %v259
    %v261 = vrot.slane %v176, %v260
    %v263 = vadd.f32 %v180, %v261
    %v264 = vadd.f32 %v185, %v261
    %v265 = vadd.f32 %v190, %v261
    %v266 = vadd.f32 %v195, %v261
    %v267 = vadd.f32 %v200, %v261
    %v268 = vadd.f32 %v205, %v261
    %v269 = vadd.f32 %v210, %v261
    %v270 = vadd.f32 %v215, %v261
    %v271 = vadd.f32 %v220, %v261
    %v272 = vadd.f32 %v225, %v261
    %v273 = vadd.f32 %v230, %v261
    %v274 = vadd.f32 %v235, %v261
    %v275 = vadd.f32 %v240, %v261
    %v276 = vadd.f32 %v245, %v261
    %v277 = vadd.f32 %v250, %v261
    %v278 = vadd.f32 %v255, %v261
    %v279 = vmul.f32 %v263, 0.2
    %v280 = vmul.f32 %v264, 0.2
    %v281 = vmul.f32 %v265, 0.2
    %v282 = vmul.f32 %v266, 0.2
    %v283 = vmul.f32 %v267, 0.2
    %v284 = vmul.f32 %v268, 0.2
    %v285 = vmul.f32 %v269, 0.2
    %v286 = vmul.f32 %v270, 0.2
    %v287 = vmul.f32 %v271, 0.2
    %v288 = vmul.f32 %v272, 0.2
    %v289 = vmul.f32 %v273, 0.2
    %v290 = vmul.f32 %v274, 0.2
    %v291 = vmul.f32 %v275, 0.2
    %v292 = vmul.f32 %v276, 0.2
    %v293 = vmul.f32 %v277, 0.2
    %v294 = vmul.f32 %v278, 0.2
    %v295 = vmax.f32 %v263, %v279
    %v296 = vmax.f32 %v264, %v280
    %v297 = vmax.f32 %v265, %v281
    %v298 = vmax.f32 %v266, %v282
    %v299 = vmax.f32 %v267, %v283
    %v300 = vmax.f32 %v268, %v284
    %v301 = vmax.f32 %v269, %v285
    %v302 = vmax.f32 %v270, %v286
    %v303 = vmax.f32 %v271, %v287
    %v304 = vmax.f32 %v272, %v288
    %v305 = vmax.f32 %v273, %v289
    %v306 = vmax.f32 %v274, %v290
    %v307 = vmax.f32 %v275, %v291
    %v308 = vmax.f32 %v276, %v292
    %v309 = vmax.f32 %v277, %v293
    %v310 = vmax.f32 %v278, %v294
    %v311 = vsel %vm156, 16843009, 0
    %v312 = vsel %vm157, 16843009, 0
    %v313 = vsel %vm158, 16843009, 0
    %v314 = vsel %vm159, 16843009, 0
    %v315 = vunpack.c.0.s8 %v311
    %v316 = vunpack.c.1.s8 %v311
    %v317 = vunpack.c.2.s8 %v311
    %v318 = vunpack.c.3.s8 %v311
    %v319 = vunpack.c.0.s8 %v312
    %v320 = vunpack.c.1.s8 %v312
    %v321 = vunpack.c.2.s8 %v312
    %v322 = vunpack.c.3.s8 %v312
    %v323 = vunpack.c.0.s8 %v313
    %v324 = vunpack.c.1.s8 %v313
    %v325 = vunpack.c.2.s8 %v313
    %v326 = vunpack.c.3.s8 %v313
    %v327 = vunpack.c.0.s8 %v314
    %v328 = vunpack.c.1.s8 %v314
    %v329 = vunpack.c.2.s8 %v314
    %v330 = vunpack.c.3.s8 %v314
    %v331 = vpack.c.b16 %v315, %v315
    %v332 = vpack.c.b8 %v331, %v331
    %v333 = vpack.c.b16 %v316, %v316
    %v334 = vpack.c.b8 %v333, %v333
    %v335 = vpack.c.b16 %v317, %v317
    %v336 = vpack.c.b8 %v335, %v335
    %v337 = vpack.c.b16 %v318, %v318
    %v338 = vpack.c.b8 %v337, %v337
    %v339 = vpack.c.b16 %v319, %v319
    %v340 = vpack.c.b8 %v339, %v339
    %v341 = vpack.c.b16 %v320, %v320
    %v342 = vpack.c.b8 %v341, %v341
    %v343 = vpack.c.b16 %v321, %v321
    %v344 = vpack.c.b8 %v343, %v343
    %v345 = vpack.c.b16 %v322, %v322
    %v346 = vpack.c.b8 %v345, %v345
    %v347 = vpack.c.b16 %v323, %v323
    %v348 = vpack.c.b8 %v347, %v347
    %v349 = vpack.c.b16 %v324, %v324
    %v350 = vpack.c.b8 %v349, %v349
    %v351 = vpack.c.b16 %v325, %v325
    %v352 = vpack.c.b8 %v351, %v351
    %v353 = vpack.c.b16 %v326, %v326
    %v354 = vpack.c.b8 %v353, %v353
    %v355 = vpack.c.b16 %v327, %v327
    %v356 = vpack.c.b8 %v355, %v355
    %v357 = vpack.c.b16 %v328, %v328
    %v358 = vpack.c.b8 %v357, %v357
    %v359 = vpack.c.b16 %v329, %v329
    %v360 = vpack.c.b8 %v359, %v359
    %v361 = vpack.c.b16 %v330, %v330
    %v362 = vpack.c.b8 %v361, %v361
    %vm363 = vnez %v332
    %vm364 = vnez %v334
    %vm365 = vnez %v336
    %vm366 = vnez %v338
    %vm367 = vnez %v340
    %vm368 = vnez %v342
    %vm369 = vnez %v344
    %vm370 = vnez %v346
    %vm371 = vnez %v348
    %vm372 = vnez %v350
    %vm373 = vnez %v352
    %vm374 = vnez %v354
    %vm375 = vnez %v356
    %vm376 = vnez %v358
    %vm377 = vnez %v360
    %vm378 = vnez %v362
    %v379 = vsel %vm363, 16843009, 0
    %v380 = vsel %vm364, 16843009, 0
    %v381 = vsel %vm365, 16843009, 0
    %v382 = vsel %vm366, 16843009, 0
    %v383 = vsel %vm367, 16843009, 0
    %v384 = vsel %vm368, 16843009, 0
    %v385 = vsel %vm369, 16843009, 0
    %v386 = vsel %vm370, 16843009, 0
    %v387 = vsel %vm371, 16843009, 0
    %v388 = vsel %vm372, 16843009, 0
    %v389 = vsel %vm373, 16843009, 0
    %v390 = vsel %vm374, 16843009, 0
    %v391 = vsel %vm375, 16843009, 0
    %v392 = vsel %vm376, 16843009, 0
    %v393 = vsel %vm377, 16843009, 0
    %v394 = vsel %vm378, 16843009, 0
    %v395 = vunpack.c.0.s8 %v379
    %v396 = vunpack.c.0.s8 %v380
    %v397 = vunpack.c.0.s8 %v381
    %v398 = vunpack.c.0.s8 %v382
    %v399 = vunpack.c.0.s8 %v383
    %v400 = vunpack.c.0.s8 %v384
    %v401 = vunpack.c.0.s8 %v385
    %v402 = vunpack.c.0.s8 %v386
    %v403 = vunpack.c.0.s8 %v387
    %v404 = vunpack.c.0.s8 %v388
    %v405 = vunpack.c.0.s8 %v389
    %v406 = vunpack.c.0.s8 %v390
    %v407 = vunpack.c.0.s8 %v391
    %v408 = vunpack.c.0.s8 %v392
    %v409 = vunpack.c.0.s8 %v393
    %v410 = vunpack.c.0.s8 %v394
    %vm411 = vcmp.ne.s32.totalorder %v395, 0
    %vm412 = vcmp.ne.s32.totalorder %v396, 0
    %vm413 = vcmp.ne.s32.totalorder %v397, 0
    %vm414 = vcmp.ne.s32.totalorder %v398, 0
    %vm415 = vcmp.ne.s32.totalorder %v399, 0
    %vm416 = vcmp.ne.s32.totalorder %v400, 0
    %vm417 = vcmp.ne.s32.totalorder %v401, 0
    %vm418 = vcmp.ne.s32.totalorder %v402, 0
    %vm419 = vcmp.ne.s32.totalorder %v403, 0
    %vm420 = vcmp.ne.s32.totalorder %v404, 0
    %vm421 = vcmp.ne.s32.totalorder %v405, 0
    %vm422 = vcmp.ne.s32.totalorder %v406, 0
    %vm423 = vcmp.ne.s32.totalorder %v407, 0
    %vm424 = vcmp.ne.s32.totalorder %v408, 0
    %vm425 = vcmp.ne.s32.totalorder %v409, 0
    %vm426 = vcmp.ne.s32.totalorder %v410, 0
    %v427 = vsel %vm411, %v295, -1e+30
    %v428 = vsel %vm412, %v296, -1e+30
    %v429 = vsel %vm413, %v297, -1e+30
    %v430 = vsel %vm414, %v298, -1e+30
    %v431 = vsel %vm415, %v299, -1e+30
    %v432 = vsel %vm416, %v300, -1e+30
    %v433 = vsel %vm417, %v301, -1e+30
    %v434 = vsel %vm418, %v302, -1e+30
    %v435 = vsel %vm419, %v303, -1e+30
    %v436 = vsel %vm420, %v304, -1e+30
    %v437 = vsel %vm421, %v305, -1e+30
    %v438 = vsel %vm422, %v306, -1e+30
    %v439 = vsel %vm423, %v307, -1e+30
    %v440 = vsel %vm424, %v308, -1e+30
    %v441 = vsel %vm425, %v309, -1e+30
    %v442 = vsel %vm426, %v310, -1e+30
    %v443 = vld [vmem:[#allocation2] sm:$0xff]
    %v444 = vld [vmem:[#allocation2 + $0x8] sm:$0xff]
    %v445 = vld [vmem:[#allocation2 + $0x10] sm:$0xff]
    %v446 = vld [vmem:[#allocation2 + $0x18] sm:$0xff]
    %v447 = vld [vmem:[#allocation2 + $0x20] sm:$0xff]
    %v448 = vld [vmem:[#allocation2 + $0x28] sm:$0xff]
    %v449 = vld [vmem:[#allocation2 + $0x30] sm:$0xff]
    %v450 = vld [vmem:[#allocation2 + $0x38] sm:$0xff]
    %v451 = vld [vmem:[#allocation2 + $0x40] sm:$0xff]
    %v452 = vld [vmem:[#allocation2 + $0x48] sm:$0xff]
    %v453 = vld [vmem:[#allocation2 + $0x50] sm:$0xff]
    %v454 = vld [vmem:[#allocation2 + $0x58] sm:$0xff]
    %v455 = vld [vmem:[#allocation2 + $0x60] sm:$0xff]
    %v456 = vld [vmem:[#allocation2 + $0x68] sm:$0xff]
    %v457 = vld [vmem:[#allocation2 + $0x70] sm:$0xff]
    %v458 = vld [vmem:[#allocation2 + $0x78] sm:$0xff]
    %459 = vmax.xlane.f32.xlu0 %v427
    %v460 = vpop.xlane.xlu0 %459
    %461 = vmax.xlane.f32.xlu0 %v428
    %v462 = vpop.xlane.xlu0 %461
    %463 = vmax.xlane.f32.xlu0 %v429
    %v464 = vpop.xlane.xlu0 %463
    %465 = vmax.xlane.f32.xlu0 %v430
    %v466 = vpop.xlane.xlu0 %465
    %467 = vmax.xlane.f32.xlu0 %v431
    %v468 = vpop.xlane.xlu0 %467
    %469 = vmax.xlane.f32.xlu0 %v432
    %v470 = vpop.xlane.xlu0 %469
    %471 = vmax.xlane.f32.xlu0 %v433
    %v472 = vpop.xlane.xlu0 %471
    %473 = vmax.xlane.f32.xlu0 %v434
    %v474 = vpop.xlane.xlu0 %473
    %475 = vmax.xlane.f32.xlu0 %v435
    %v476 = vpop.xlane.xlu0 %475
    %477 = vmax.xlane.f32.xlu0 %v436
    %v478 = vpop.xlane.xlu0 %477
    %479 = vmax.xlane.f32.xlu0 %v437
    %v480 = vpop.xlane.xlu0 %479
    %481 = vmax.xlane.f32.xlu0 %v438
    %v482 = vpop.xlane.xlu0 %481
    %483 = vmax.xlane.f32.xlu0 %v439
    %v484 = vpop.xlane.xlu0 %483
    %485 = vmax.xlane.f32.xlu0 %v440
    %v486 = vpop.xlane.xlu0 %485
    %487 = vmax.xlane.f32.xlu0 %v441
    %v488 = vpop.xlane.xlu0 %487
    %489 = vmax.xlane.f32.xlu0 %v442
    %v490 = vpop.xlane.xlu0 %489
    %v491 = vmax.f32 %v443, %v460
    %v492 = vmax.f32 %v444, %v462
    %v493 = vmax.f32 %v445, %v464
    %v494 = vmax.f32 %v446, %v466
    %v495 = vmax.f32 %v447, %v468
    %v496 = vmax.f32 %v448, %v470
    %v497 = vmax.f32 %v449, %v472
    %v498 = vmax.f32 %v450, %v474
    %v499 = vmax.f32 %v451, %v476
    %v500 = vmax.f32 %v452, %v478
    %v501 = vmax.f32 %v453, %v480
    %v502 = vmax.f32 %v454, %v482
    %v503 = vmax.f32 %v455, %v484
    %v504 = vmax.f32 %v456, %v486
    %v505 = vmax.f32 %v457, %v488
    %v506 = vmax.f32 %v458, %v490
    %v507 = vsub.f32 %v443, %v491
    %v508 = vsub.f32 %v444, %v492
    %v509 = vsub.f32 %v445, %v493
    %v510 = vsub.f32 %v446, %v494
    %v511 = vsub.f32 %v447, %v495
    %v512 = vsub.f32 %v448, %v496
    %v513 = vsub.f32 %v449, %v497
    %v514 = vsub.f32 %v450, %v498
    %v515 = vsub.f32 %v451, %v499
    %v516 = vsub.f32 %v452, %v500
    %v517 = vsub.f32 %v453, %v501
    %v518 = vsub.f32 %v454, %v502
    %v519 = vsub.f32 %v455, %v503
    %v520 = vsub.f32 %v456, %v504
    %v521 = vsub.f32 %v457, %v505
    %v522 = vsub.f32 %v458, %v506
    %v523 = vmul.f32 %v507, 1.442695
    %v524 = vpow.pop %v523
    %v525 = vmul.f32 %v508, 1.442695
    %v526 = vpow.pop %v525
    %v527 = vmul.f32 %v509, 1.442695
    %v528 = vpow.pop %v527
    %v529 = vmul.f32 %v510, 1.442695
    %v530 = vpow.pop %v529
    %v531 = vmul.f32 %v511, 1.442695
    %v532 = vpow.pop %v531
    %v533 = vmul.f32 %v512, 1.442695
    %v534 = vpow.pop %v533
    %v535 = vmul.f32 %v513, 1.442695
    %v536 = vpow.pop %v535
    %v537 = vmul.f32 %v514, 1.442695
    %v538 = vpow.pop %v537
    %v539 = vmul.f32 %v515, 1.442695
    %v540 = vpow.pop %v539
    %v541 = vmul.f32 %v516, 1.442695
    %v542 = vpow.pop %v541
    %v543 = vmul.f32 %v517, 1.442695
    %v544 = vpow.pop %v543
    %v545 = vmul.f32 %v518, 1.442695
    %v546 = vpow.pop %v545
    %v547 = vmul.f32 %v519, 1.442695
    %v548 = vpow.pop %v547
    %v549 = vmul.f32 %v520, 1.442695
    %v550 = vpow.pop %v549
    %v551 = vmul.f32 %v521, 1.442695
    %v552 = vpow.pop %v551
    %v553 = vmul.f32 %v522, 1.442695
    %v554 = vpow.pop %v553
    %556 = vset.pattern.permute.xlu0 0
    %557 = vperm.xlu0 %556, %v491
    %v558 = vpop.permute.xlu0 %557
    %561 = vset.pattern.permute.xlu0 0
    %562 = vperm.xlu0 %561, %v492
    %v563 = vpop.permute.xlu0 %562
    %566 = vset.pattern.permute.xlu0 0
    %567 = vperm.xlu0 %566, %v493
    %v568 = vpop.permute.xlu0 %567
    %571 = vset.pattern.permute.xlu0 0
    %572 = vperm.xlu0 %571, %v494
    %v573 = vpop.permute.xlu0 %572
    %576 = vset.pattern.permute.xlu0 0
    %577 = vperm.xlu0 %576, %v495
    %v578 = vpop.permute.xlu0 %577
    %581 = vset.pattern.permute.xlu0 0
    %582 = vperm.xlu0 %581, %v496
    %v583 = vpop.permute.xlu0 %582
    %586 = vset.pattern.permute.xlu0 0
    %587 = vperm.xlu0 %586, %v497
    %v588 = vpop.permute.xlu0 %587
    %591 = vset.pattern.permute.xlu0 0
    %592 = vperm.xlu0 %591, %v498
    %v593 = vpop.permute.xlu0 %592
    %596 = vset.pattern.permute.xlu0 0
    %597 = vperm.xlu0 %596, %v499
    %v598 = vpop.permute.xlu0 %597
    %601 = vset.pattern.permute.xlu0 0
    %602 = vperm.xlu0 %601, %v500
    %v603 = vpop.permute.xlu0 %602
    %606 = vset.pattern.permute.xlu0 0
    %607 = vperm.xlu0 %606, %v501
    %v608 = vpop.permute.xlu0 %607
    %611 = vset.pattern.permute.xlu0 0
    %612 = vperm.xlu0 %611, %v502
    %v613 = vpop.permute.xlu0 %612
    %616 = vset.pattern.permute.xlu0 0
    %617 = vperm.xlu0 %616, %v503
    %v618 = vpop.permute.xlu0 %617
    %621 = vset.pattern.permute.xlu0 0
    %622 = vperm.xlu0 %621, %v504
    %v623 = vpop.permute.xlu0 %622
    %626 = vset.pattern.permute.xlu0 0
    %627 = vperm.xlu0 %626, %v505
    %v628 = vpop.permute.xlu0 %627
    %631 = vset.pattern.permute.xlu0 0
    %632 = vperm.xlu0 %631, %v506
    %v633 = vpop.permute.xlu0 %632
    %v635 = vsub.f32 %v427, %v558
    %v636 = vsub.f32 %v428, %v563
    %v637 = vsub.f32 %v429, %v568
    %v638 = vsub.f32 %v430, %v573
    %v639 = vsub.f32 %v431, %v578
    %v640 = vsub.f32 %v432, %v583
    %v641 = vsub.f32 %v433, %v588
    %v642 = vsub.f32 %v434, %v593
    %v643 = vsub.f32 %v435, %v598
    %v644 = vsub.f32 %v436, %v603
    %v645 = vsub.f32 %v437, %v608
    %v646 = vsub.f32 %v438, %v613
    %v647 = vsub.f32 %v439, %v618
    %v648 = vsub.f32 %v440, %v623
    %v649 = vsub.f32 %v441, %v628
    %v650 = vsub.f32 %v442, %v633
    %v651 = vmul.f32 %v635, 1.442695
    %v652 = vpow.pop %v651
    %v653 = vmul.f32 %v636, 1.442695
    %v654 = vpow.pop %v653
    %v655 = vmul.f32 %v637, 1.442695
    %v656 = vpow.pop %v655
    %v657 = vmul.f32 %v638, 1.442695
    %v658 = vpow.pop %v657
    %v659 = vmul.f32 %v639, 1.442695
    %v660 = vpow.pop %v659
    %v661 = vmul.f32 %v640, 1.442695
    %v662 = vpow.pop %v661
    %v663 = vmul.f32 %v641, 1.442695
    %v664 = vpow.pop %v663
    %v665 = vmul.f32 %v642, 1.442695
    %v666 = vpow.pop %v665
    %v667 = vmul.f32 %v643, 1.442695
    %v668 = vpow.pop %v667
    %v669 = vmul.f32 %v644, 1.442695
    %v670 = vpow.pop %v669
    %v671 = vmul.f32 %v645, 1.442695
    %v672 = vpow.pop %v671
    %v673 = vmul.f32 %v646, 1.442695
    %v674 = vpow.pop %v673
    %v675 = vmul.f32 %v647, 1.442695
    %v676 = vpow.pop %v675
    %v677 = vmul.f32 %v648, 1.442695
    %v678 = vpow.pop %v677
    %v679 = vmul.f32 %v649, 1.442695
    %v680 = vpow.pop %v679
    %v681 = vmul.f32 %v650, 1.442695
    %v682 = vpow.pop %v681
    %v683 = vsel %vm411, %v652, 0.0
    %v684 = vsel %vm412, %v654, 0.0
    %v685 = vsel %vm413, %v656, 0.0
    %v686 = vsel %vm414, %v658, 0.0
    %v687 = vsel %vm415, %v660, 0.0
    %v688 = vsel %vm416, %v662, 0.0
    %v689 = vsel %vm417, %v664, 0.0
    %v690 = vsel %vm418, %v666, 0.0
    %v691 = vsel %vm419, %v668, 0.0
    %v692 = vsel %vm420, %v670, 0.0
    %v693 = vsel %vm421, %v672, 0.0
    %v694 = vsel %vm422, %v674, 0.0
    %v695 = vsel %vm423, %v676, 0.0
    %v696 = vsel %vm424, %v678, 0.0
    %v697 = vsel %vm425, %v680, 0.0
    %v698 = vsel %vm426, %v682, 0.0
    %s699 = sadd.s32 0, 0
    %s700 = smul.u32 %s699, 128
    %s701 = sadd.s32 %s700, 0
    %s702 = sld [smem:[#allocation6 + %s701]]
    %s703 = smul.u32 %s702, 128
    %s704 = sshra.s32 %s703, 3
    %s705 = sand.u32 %s703, 7
    %s706 = smul.addr %s704, 4
    %s707 = scalar_lea.vmem %s5, %s706
    %v708 = vld [vmem:[%s707] sm:$0xf]
    %v709 = vld [vmem:[%s707 + $0x4] sm:$0xf]
    %v710 = vld [vmem:[%s707 + $0x8] sm:$0xf]
    %v711 = vld [vmem:[%s707 + $0xc] sm:$0xf]
    %v712 = vld [vmem:[%s707 + $0x10] sm:$0xf]
    %v713 = vld [vmem:[%s707 + $0x14] sm:$0xf]
    %v714 = vld [vmem:[%s707 + $0x18] sm:$0xf]
    %v715 = vld [vmem:[%s707 + $0x1c] sm:$0xf]
    %v716 = vld [vmem:[%s707 + $0x20] sm:$0xf]
    %v717 = vld [vmem:[%s707 + $0x24] sm:$0xf]
    %v718 = vld [vmem:[%s707 + $0x28] sm:$0xf]
    %v719 = vld [vmem:[%s707 + $0x2c] sm:$0xf]
    %v720 = vld [vmem:[%s707 + $0x30] sm:$0xf]
    %v721 = vld [vmem:[%s707 + $0x34] sm:$0xf]
    %v722 = vld [vmem:[%s707 + $0x38] sm:$0xf]
    %v723 = vld [vmem:[%s707 + $0x3c] sm:$0xf]
    %vm724 = vcmask 7168
    %725 = vst.msk [vmem:[#allocation2] sm:$0xff] %vm724, %v491
    %726 = vst.msk [vmem:[#allocation2 + $0x8] sm:$0xff] %vm724, %v492
    %727 = vst.msk [vmem:[#allocation2 + $0x10] sm:$0xff] %vm724, %v493
    %728 = vst.msk [vmem:[#allocation2 + $0x18] sm:$0xff] %vm724, %v494
    %729 = vst.msk [vmem:[#allocation2 + $0x20] sm:$0xff] %vm724, %v495
    %730 = vst.msk [vmem:[#allocation2 + $0x28] sm:$0xff] %vm724, %v496
    %731 = vst.msk [vmem:[#allocation2 + $0x30] sm:$0xff] %vm724, %v497
    %732 = vst.msk [vmem:[#allocation2 + $0x38] sm:$0xff] %vm724, %v498
    %733 = vst.msk [vmem:[#allocation2 + $0x40] sm:$0xff] %vm724, %v499
    %734 = vst.msk [vmem:[#allocation2 + $0x48] sm:$0xff] %vm724, %v500
    %735 = vst.msk [vmem:[#allocation2 + $0x50] sm:$0xff] %vm724, %v501
    %736 = vst.msk [vmem:[#allocation2 + $0x58] sm:$0xff] %vm724, %v502
    %737 = vst.msk [vmem:[#allocation2 + $0x60] sm:$0xff] %vm724, %v503
    %738 = vst.msk [vmem:[#allocation2 + $0x68] sm:$0xff] %vm724, %v504
    %739 = vst.msk [vmem:[#allocation2 + $0x70] sm:$0xff] %vm724, %v505
    %740 = vst.msk [vmem:[#allocation2 + $0x78] sm:$0xff] %vm724, %v506
    %v741 = vld [vmem:[#allocation3] sm:$0xff]
    %v742 = vld [vmem:[#allocation3 + $0x8] sm:$0xff]
    %v743 = vld [vmem:[#allocation3 + $0x10] sm:$0xff]
    %v744 = vld [vmem:[#allocation3 + $0x18] sm:$0xff]
    %v745 = vld [vmem:[#allocation3 + $0x20] sm:$0xff]
    %v746 = vld [vmem:[#allocation3 + $0x28] sm:$0xff]
    %v747 = vld [vmem:[#allocation3 + $0x30] sm:$0xff]
    %v748 = vld [vmem:[#allocation3 + $0x38] sm:$0xff]
    %v749 = vld [vmem:[#allocation3 + $0x40] sm:$0xff]
    %v750 = vld [vmem:[#allocation3 + $0x48] sm:$0xff]
    %v751 = vld [vmem:[#allocation3 + $0x50] sm:$0xff]
    %v752 = vld [vmem:[#allocation3 + $0x58] sm:$0xff]
    %v753 = vld [vmem:[#allocation3 + $0x60] sm:$0xff]
    %v754 = vld [vmem:[#allocation3 + $0x68] sm:$0xff]
    %v755 = vld [vmem:[#allocation3 + $0x70] sm:$0xff]
    %v756 = vld [vmem:[#allocation3 + $0x78] sm:$0xff]
    %v757 = vmul.f32 %v524, %v741
    %v758 = vmul.f32 %v526, %v742
    %v759 = vmul.f32 %v528, %v743
    %v760 = vmul.f32 %v530, %v744
    %v761 = vmul.f32 %v532, %v745
    %v762 = vmul.f32 %v534, %v746
    %v763 = vmul.f32 %v536, %v747
    %v764 = vmul.f32 %v538, %v748
    %v765 = vmul.f32 %v540, %v749
    %v766 = vmul.f32 %v542, %v750
    %v767 = vmul.f32 %v544, %v751
    %v768 = vmul.f32 %v546, %v752
    %v769 = vmul.f32 %v548, %v753
    %v770 = vmul.f32 %v550, %v754
    %v771 = vmul.f32 %v552, %v755
    %v772 = vmul.f32 %v554, %v756
    %773 = vadd.xlane.f32.xlu0 %v683
    %v774 = vpop.xlane.xlu0 %773
    %775 = vadd.xlane.f32.xlu0 %v684
    %v776 = vpop.xlane.xlu0 %775
    %777 = vadd.xlane.f32.xlu0 %v685
    %v778 = vpop.xlane.xlu0 %777
    %779 = vadd.xlane.f32.xlu0 %v686
    %v780 = vpop.xlane.xlu0 %779
    %781 = vadd.xlane.f32.xlu0 %v687
    %v782 = vpop.xlane.xlu0 %781
    %783 = vadd.xlane.f32.xlu0 %v688
    %v784 = vpop.xlane.xlu0 %783
    %785 = vadd.xlane.f32.xlu0 %v689
    %v786 = vpop.xlane.xlu0 %785
    %787 = vadd.xlane.f32.xlu0 %v690
    %v788 = vpop.xlane.xlu0 %787
    %789 = vadd.xlane.f32.xlu0 %v691
    %v790 = vpop.xlane.xlu0 %789
    %791 = vadd.xlane.f32.xlu0 %v692
    %v792 = vpop.xlane.xlu0 %791
    %793 = vadd.xlane.f32.xlu0 %v693
    %v794 = vpop.xlane.xlu0 %793
    %795 = vadd.xlane.f32.xlu0 %v694
    %v796 = vpop.xlane.xlu0 %795
    %797 = vadd.xlane.f32.xlu0 %v695
    %v798 = vpop.xlane.xlu0 %797
    %799 = vadd.xlane.f32.xlu0 %v696
    %v800 = vpop.xlane.xlu0 %799
    %801 = vadd.xlane.f32.xlu0 %v697
    %v802 = vpop.xlane.xlu0 %801
    %803 = vadd.xlane.f32.xlu0 %v698
    %v804 = vpop.xlane.xlu0 %803
    %v805 = vadd.f32 %v757, %v774
    %v806 = vadd.f32 %v758, %v776
    %v807 = vadd.f32 %v759, %v778
    %v808 = vadd.f32 %v760, %v780
    %v809 = vadd.f32 %v761, %v782
    %v810 = vadd.f32 %v762, %v784
    %v811 = vadd.f32 %v763, %v786
    %v812 = vadd.f32 %v764, %v788
    %v813 = vadd.f32 %v765, %v790
    %v814 = vadd.f32 %v766, %v792
    %v815 = vadd.f32 %v767, %v794
    %v816 = vadd.f32 %v768, %v796
    %v817 = vadd.f32 %v769, %v798
    %v818 = vadd.f32 %v770, %v800
    %v819 = vadd.f32 %v771, %v802
    %v820 = vadd.f32 %v772, %v804
    %821 = vst.msk [vmem:[#allocation3] sm:$0xff] %vm724, %v805
    %822 = vst.msk [vmem:[#allocation3 + $0x8] sm:$0xff] %vm724, %v806
    %823 = vst.msk [vmem:[#allocation3 + $0x10] sm:$0xff] %vm724, %v807
    %824 = vst.msk [vmem:[#allocation3 + $0x18] sm:$0xff] %vm724, %v808
    %825 = vst.msk [vmem:[#allocation3 + $0x20] sm:$0xff] %vm724, %v809
    %826 = vst.msk [vmem:[#allocation3 + $0x28] sm:$0xff] %vm724, %v810
    %827 = vst.msk [vmem:[#allocation3 + $0x30] sm:$0xff] %vm724, %v811
    %828 = vst.msk [vmem:[#allocation3 + $0x38] sm:$0xff] %vm724, %v812
    %829 = vst.msk [vmem:[#allocation3 + $0x40] sm:$0xff] %vm724, %v813
    %830 = vst.msk [vmem:[#allocation3 + $0x48] sm:$0xff] %vm724, %v814
    %831 = vst.msk [vmem:[#allocation3 + $0x50] sm:$0xff] %vm724, %v815
    %832 = vst.msk [vmem:[#allocation3 + $0x58] sm:$0xff] %vm724, %v816
    %833 = vst.msk [vmem:[#allocation3 + $0x60] sm:$0xff] %vm724, %v817
    %834 = vst.msk [vmem:[#allocation3 + $0x68] sm:$0xff] %vm724, %v818
    %835 = vst.msk [vmem:[#allocation3 + $0x70] sm:$0xff] %vm724, %v819
    %836 = vst.msk [vmem:[#allocation3 + $0x78] sm:$0xff] %vm724, %v820
    %v837 = vld [vmem:[#allocation4] sm:$0xff]
    %v838 = vld [vmem:[#allocation4 + $0x8] sm:$0xff]
    %v839 = vld [vmem:[#allocation4 + $0x10] sm:$0xff]
    %v840 = vld [vmem:[#allocation4 + $0x18] sm:$0xff]
    %v841 = vld [vmem:[#allocation4 + $0x20] sm:$0xff]
    %v842 = vld [vmem:[#allocation4 + $0x28] sm:$0xff]
    %v843 = vld [vmem:[#allocation4 + $0x30] sm:$0xff]
    %v844 = vld [vmem:[#allocation4 + $0x38] sm:$0xff]
    %v845 = vld [vmem:[#allocation4 + $0x40] sm:$0xff]
    %v846 = vld [vmem:[#allocation4 + $0x48] sm:$0xff]
    %v847 = vld [vmem:[#allocation4 + $0x50] sm:$0xff]
    %v848 = vld [vmem:[#allocation4 + $0x58] sm:$0xff]
    %v849 = vld [vmem:[#allocation4 + $0x60] sm:$0xff]
    %v850 = vld [vmem:[#allocation4 + $0x68] sm:$0xff]
    %v851 = vld [vmem:[#allocation4 + $0x70] sm:$0xff]
    %v852 = vld [vmem:[#allocation4 + $0x78] sm:$0xff]
    %854 = vset.pattern.permute.xlu0 0
    %855 = vperm.xlu0 %854, %v524
    %v856 = vpop.permute.xlu0 %855
    %859 = vset.pattern.permute.xlu0 0
    %860 = vperm.xlu0 %859, %v526
    %v861 = vpop.permute.xlu0 %860
    %864 = vset.pattern.permute.xlu0 0
    %865 = vperm.xlu0 %864, %v528
    %v866 = vpop.permute.xlu0 %865
    %869 = vset.pattern.permute.xlu0 0
    %870 = vperm.xlu0 %869, %v530
    %v871 = vpop.permute.xlu0 %870
    %874 = vset.pattern.permute.xlu0 0
    %875 = vperm.xlu0 %874, %v532
    %v876 = vpop.permute.xlu0 %875
    %879 = vset.pattern.permute.xlu0 0
    %880 = vperm.xlu0 %879, %v534
    %v881 = vpop.permute.xlu0 %880
    %884 = vset.pattern.permute.xlu0 0
    %885 = vperm.xlu0 %884, %v536
    %v886 = vpop.permute.xlu0 %885
    %889 = vset.pattern.permute.xlu0 0
    %890 = vperm.xlu0 %889, %v538
    %v891 = vpop.permute.xlu0 %890
    %894 = vset.pattern.permute.xlu0 0
    %895 = vperm.xlu0 %894, %v540
    %v896 = vpop.permute.xlu0 %895
    %899 = vset.pattern.permute.xlu0 0
    %900 = vperm.xlu0 %899, %v542
    %v901 = vpop.permute.xlu0 %900
    %904 = vset.pattern.permute.xlu0 0
    %905 = vperm.xlu0 %904, %v544
    %v906 = vpop.permute.xlu0 %905
    %909 = vset.pattern.permute.xlu0 0
    %910 = vperm.xlu0 %909, %v546
    %v911 = vpop.permute.xlu0 %910
    %914 = vset.pattern.permute.xlu0 0
    %915 = vperm.xlu0 %914, %v548
    %v916 = vpop.permute.xlu0 %915
    %919 = vset.pattern.permute.xlu0 0
    %920 = vperm.xlu0 %919, %v550
    %v921 = vpop.permute.xlu0 %920
    %924 = vset.pattern.permute.xlu0 0
    %925 = vperm.xlu0 %924, %v552
    %v926 = vpop.permute.xlu0 %925
    %929 = vset.pattern.permute.xlu0 0
    %930 = vperm.xlu0 %929, %v554
    %v931 = vpop.permute.xlu0 %930
    %v933 = vmul.f32 %v856, %v837
    %v934 = vmul.f32 %v861, %v838
    %v935 = vmul.f32 %v866, %v839
    %v936 = vmul.f32 %v871, %v840
    %v937 = vmul.f32 %v876, %v841
    %v938 = vmul.f32 %v881, %v842
    %v939 = vmul.f32 %v886, %v843
    %v940 = vmul.f32 %v891, %v844
    %v941 = vmul.f32 %v896, %v845
    %v942 = vmul.f32 %v901, %v846
    %v943 = vmul.f32 %v906, %v847
    %v944 = vmul.f32 %v911, %v848
    %v945 = vmul.f32 %v916, %v849
    %v946 = vmul.f32 %v921, %v850
    %v947 = vmul.f32 %v926, %v851
    %v948 = vmul.f32 %v931, %v852
    %v949 = vpack.c.bf16 %v684, %v683
    %v950 = vpack.c.bf16 %v686, %v685
    %v951 = vpack.c.bf16 %v688, %v687
    %v952 = vpack.c.bf16 %v690, %v689
    %v953 = vpack.c.bf16 %v692, %v691
    %v954 = vpack.c.bf16 %v694, %v693
    %v955 = vpack.c.bf16 %v696, %v695
    %v956 = vpack.c.bf16 %v698, %v697
    %v973 = vunpack.c.l.b16 %v708
    %v974 = vunpack.c.l.b16 %v709
    %v975 = vunpack.c.l.b16 %v710
    %v976 = vunpack.c.l.b16 %v711
    %v977 = vunpack.c.l.b16 %v712
    %v978 = vunpack.c.l.b16 %v713
    %v979 = vunpack.c.l.b16 %v714
    %v980 = vunpack.c.l.b16 %v715
    %v981 = vunpack.c.l.b16 %v716
    %v982 = vunpack.c.l.b16 %v717
    %v983 = vunpack.c.l.b16 %v718
    %v984 = vunpack.c.l.b16 %v719
    %v985 = vunpack.c.l.b16 %v720
    %v986 = vunpack.c.l.b16 %v721
    %v987 = vunpack.c.l.b16 %v722
    %v988 = vunpack.c.l.b16 %v723
    %v989 = vpack.c.b16 %v974, %v973
    %v990 = vpack.c.b16 %v976, %v975
    %v991 = vpack.c.b16 %v978, %v977
    %v992 = vpack.c.b16 %v980, %v979
    %v993 = vpack.c.b16 %v982, %v981
    %v994 = vpack.c.b16 %v984, %v983
    %v995 = vpack.c.b16 %v986, %v985
    %v996 = vpack.c.b16 %v988, %v987
    %1005 = vmatprep.subr.bf16.mxu0 0
    %1006 = vmatpush1.bf16.msra.mxu0 %v996
    %1007 = vmatprep.subr.bf16.mxu0 0
    %1008 = vmatpush1.bf16.msra.mxu0 %v995
    %1009 = vmatprep.subr.bf16.mxu0 0
    %1010 = vmatpush1.bf16.msra.mxu0 %v994
    %1011 = vmatprep.subr.bf16.mxu0 0
    %1012 = vmatpush1.bf16.msra.mxu0 %v993
    %1013 = vmatprep.subr.bf16.mxu0 0
    %1014 = vmatpush1.bf16.msra.mxu0 %v992
    %1015 = vmatprep.subr.bf16.mxu0 0
    %1016 = vmatpush1.bf16.msra.mxu0 %v991
    %1017 = vmatprep.subr.bf16.mxu0 0
    %1018 = vmatpush1.bf16.msra.mxu0 %v990
    %1019 = vmatprep.subr.bf16.mxu0 0
    %1020 = vmatpush1.bf16.msra.mxu0 %v989
    %1021 = vmatprep.subr.bf16.mxu0 0
    %1022 = vmatpush2.bf16.msra.mxu0 0
    %1023 = vmatprep.subr.bf16.mxu0 0
    %1024 = vmatpush2.bf16.msra.mxu0 0
    %1025 = vmatprep.subr.bf16.mxu0 0
    %1026 = vmatpush2.bf16.msra.mxu0 0
    %1027 = vmatprep.subr.bf16.mxu0 0
    %1028 = vmatpush2.bf16.msra.mxu0 0
    %1029 = vmatprep.subr.bf16.mxu0 0
    %1030 = vmatpush2.bf16.msra.mxu0 0
    %1031 = vmatprep.subr.bf16.mxu0 0
    %1032 = vmatpush2.bf16.msra.mxu0 0
    %1033 = vmatprep.subr.bf16.mxu0 0
    %1034 = vmatpush2.bf16.msra.mxu0 0
    %1035 = vmatprep.subr.bf16.mxu0 0
    %1036 = vmatpush2.bf16.msra.mxu0 0
    %1037 = vmatprep.mubr.bf16.mxu0 0
    %1038 = vmatmul.mubr.bf16.gmra.mxu0 %v949
    %v1039 = vpop.f32.mrf.mxu0
    %v1040 = vadd.f32 0.0, %v1039
    %v1041 = vpop.f32.mrf.mxu0
    %v1042 = vpop.f32.mrf.mxu0
    %v1043 = vadd.f32 0.0, %v1042
    %v1044 = vpop.f32.mrf.mxu0
    %1045 = vmatprep.mubr.bf16.mxu0 0
    %1046 = vmatmul.mubr.bf16.gmra.mxu0 %v950
    %v1047 = vpop.f32.mrf.mxu0
    %v1048 = vadd.f32 0.0, %v1047
    %v1049 = vpop.f32.mrf.mxu0
    %v1050 = vpop.f32.mrf.mxu0
    %v1051 = vadd.f32 0.0, %v1050
    %v1052 = vpop.f32.mrf.mxu0
    %1053 = vmatprep.mubr.bf16.mxu0 0
    %1054 = vmatmul.mubr.bf16.gmra.mxu0 %v951
    %v1055 = vpop.f32.mrf.mxu0
    %v1056 = vadd.f32 0.0, %v1055
    %v1057 = vpop.f32.mrf.mxu0
    %v1058 = vpop.f32.mrf.mxu0
    %v1059 = vadd.f32 0.0, %v1058
    %v1060 = vpop.f32.mrf.mxu0
    %1061 = vmatprep.mubr.bf16.mxu0 0
    %1062 = vmatmul.mubr.bf16.gmra.mxu0 %v952
    %v1063 = vpop.f32.mrf.mxu0
    %v1064 = vadd.f32 0.0, %v1063
    %v1065 = vpop.f32.mrf.mxu0
    %v1066 = vpop.f32.mrf.mxu0
    %v1067 = vadd.f32 0.0, %v1066
    %v1068 = vpop.f32.mrf.mxu0
    %1069 = vmatprep.mubr.bf16.mxu0 0
    %1070 = vmatmul.mubr.bf16.gmra.mxu0 %v953
    %v1071 = vpop.f32.mrf.mxu0
    %v1072 = vadd.f32 0.0, %v1071
    %v1073 = vpop.f32.mrf.mxu0
    %v1074 = vpop.f32.mrf.mxu0
    %v1075 = vadd.f32 0.0, %v1074
    %v1076 = vpop.f32.mrf.mxu0
    %1077 = vmatprep.mubr.bf16.mxu0 0
    %1078 = vmatmul.mubr.bf16.gmra.mxu0 %v954
    %v1079 = vpop.f32.mrf.mxu0
    %v1080 = vadd.f32 0.0, %v1079
    %v1081 = vpop.f32.mrf.mxu0
    %v1082 = vpop.f32.mrf.mxu0
    %v1083 = vadd.f32 0.0, %v1082
    %v1084 = vpop.f32.mrf.mxu0
    %1085 = vmatprep.mubr.bf16.mxu0 0
    %1086 = vmatmul.mubr.bf16.gmra.mxu0 %v955
    %v1087 = vpop.f32.mrf.mxu0
    %v1088 = vadd.f32 0.0, %v1087
    %v1089 = vpop.f32.mrf.mxu0
    %v1090 = vpop.f32.mrf.mxu0
    %v1091 = vadd.f32 0.0, %v1090
    %v1092 = vpop.f32.mrf.mxu0
    %1093 = vmatprep.mubr.bf16.mxu0 0
    %1094 = vmatmul.mubr.bf16.gmra.mxu0 %v956
    %v1095 = vpop.f32.mrf.mxu0
    %v1096 = vadd.f32 0.0, %v1095
    %v1097 = vpop.f32.mrf.mxu0
    %v1098 = vpop.f32.mrf.mxu0
    %v1099 = vadd.f32 0.0, %v1098
    %v1100 = vpop.f32.mrf.mxu0
    %1101 = vdwg.mxu0
    %v1102 = vadd.f32 %v933, %v1040
    %v1103 = vadd.f32 %v934, %v1043
    %v1104 = vadd.f32 %v935, %v1048
    %v1105 = vadd.f32 %v936, %v1051
    %v1106 = vadd.f32 %v937, %v1056
    %v1107 = vadd.f32 %v938, %v1059
    %v1108 = vadd.f32 %v939, %v1064
    %v1109 = vadd.f32 %v940, %v1067
    %v1110 = vadd.f32 %v941, %v1072
    %v1111 = vadd.f32 %v942, %v1075
    %v1112 = vadd.f32 %v943, %v1080
    %v1113 = vadd.f32 %v944, %v1083
    %v1114 = vadd.f32 %v945, %v1088
    %v1115 = vadd.f32 %v946, %v1091
    %v1116 = vadd.f32 %v947, %v1096
    %v1117 = vadd.f32 %v948, %v1099
    %1118 = vst [vmem:[#allocation4] sm:$0xff] %v1102
    %1119 = vst [vmem:[#allocation4 + $0x8] sm:$0xff] %v1103
    %1120 = vst [vmem:[#allocation4 + $0x10] sm:$0xff] %v1104
    %1121 = vst [vmem:[#allocation4 + $0x18] sm:$0xff] %v1105
    %1122 = vst [vmem:[#allocation4 + $0x20] sm:$0xff] %v1106
    %1123 = vst [vmem:[#allocation4 + $0x28] sm:$0xff] %v1107
    %1124 = vst [vmem:[#allocation4 + $0x30] sm:$0xff] %v1108
    %1125 = vst [vmem:[#allocation4 + $0x38] sm:$0xff] %v1109
    %1126 = vst [vmem:[#allocation4 + $0x40] sm:$0xff] %v1110
    %1127 = vst [vmem:[#allocation4 + $0x48] sm:$0xff] %v1111
    %1128 = vst [vmem:[#allocation4 + $0x50] sm:$0xff] %v1112
    %1129 = vst [vmem:[#allocation4 + $0x58] sm:$0xff] %v1113
    %1130 = vst [vmem:[#allocation4 + $0x60] sm:$0xff] %v1114
    %1131 = vst [vmem:[#allocation4 + $0x68] sm:$0xff] %v1115
    %1132 = vst [vmem:[#allocation4 + $0x70] sm:$0xff] %v1116
    %1133 = vst [vmem:[#allocation4 + $0x78] sm:$0xff] %v1117
  $region37: #{hetero_gat_forward.6} parent=0 // pred_fallthru
    _
  // Predicated region
  $region38: #{hetero_gat_forward.6} parent=0 // pred_check
    %p1134 = pneg %p94
  $region39: #{hetero_gat_forward.6} parent=0 // pred_check_branch
    %1136 = sbr.rel (%p1134) target = $region41
  $region40: #{hetero_gat_forward.6} parent=0 // pred_region
    %v1137 = vld [vmem:[#allocation3] sm:$0xff]
    %v1138 = vld [vmem:[#allocation3 + $0x8] sm:$0xff]
    %v1139 = vld [vmem:[#allocation3 + $0x10] sm:$0xff]
    %v1140 = vld [vmem:[#allocation3 + $0x18] sm:$0xff]
    %v1141 = vld [vmem:[#allocation3 + $0x20] sm:$0xff]
    %v1142 = vld [vmem:[#allocation3 + $0x28] sm:$0xff]
    %v1143 = vld [vmem:[#allocation3 + $0x30] sm:$0xff]
    %v1144 = vld [vmem:[#allocation3 + $0x38] sm:$0xff]
    %v1145 = vld [vmem:[#allocation3 + $0x40] sm:$0xff]
    %v1146 = vld [vmem:[#allocation3 + $0x48] sm:$0xff]
    %v1147 = vld [vmem:[#allocation3 + $0x50] sm:$0xff]
    %v1148 = vld [vmem:[#allocation3 + $0x58] sm:$0xff]
    %v1149 = vld [vmem:[#allocation3 + $0x60] sm:$0xff]
    %v1150 = vld [vmem:[#allocation3 + $0x68] sm:$0xff]
    %v1151 = vld [vmem:[#allocation3 + $0x70] sm:$0xff]
    %v1152 = vld [vmem:[#allocation3 + $0x78] sm:$0xff]
    %vm1153 = vcmp.gt.f32.partialorder %v1137, 0.0
    %vm1154 = vcmp.gt.f32.partialorder %v1138, 0.0
    %vm1155 = vcmp.gt.f32.partialorder %v1139, 0.0
    %vm1156 = vcmp.gt.f32.partialorder %v1140, 0.0
    %vm1157 = vcmp.gt.f32.partialorder %v1141, 0.0
    %vm1158 = vcmp.gt.f32.partialorder %v1142, 0.0
    %vm1159 = vcmp.gt.f32.partialorder %v1143, 0.0
    %vm1160 = vcmp.gt.f32.partialorder %v1144, 0.0
    %vm1161 = vcmp.gt.f32.partialorder %v1145, 0.0
    %vm1162 = vcmp.gt.f32.partialorder %v1146, 0.0
    %vm1163 = vcmp.gt.f32.partialorder %v1147, 0.0
    %vm1164 = vcmp.gt.f32.partialorder %v1148, 0.0
    %vm1165 = vcmp.gt.f32.partialorder %v1149, 0.0
    %vm1166 = vcmp.gt.f32.partialorder %v1150, 0.0
    %vm1167 = vcmp.gt.f32.partialorder %v1151, 0.0
    %vm1168 = vcmp.gt.f32.partialorder %v1152, 0.0
    %v1169 = vsel %vm1153, %v1137, 1.0
    %v1170 = vsel %vm1154, %v1138, 1.0
    %v1171 = vsel %vm1155, %v1139, 1.0
    %v1172 = vsel %vm1156, %v1140, 1.0
    %v1173 = vsel %vm1157, %v1141, 1.0
    %v1174 = vsel %vm1158, %v1142, 1.0
    %v1175 = vsel %vm1159, %v1143, 1.0
    %v1176 = vsel %vm1160, %v1144, 1.0
    %v1177 = vsel %vm1161, %v1145, 1.0
    %v1178 = vsel %vm1162, %v1146, 1.0
    %v1179 = vsel %vm1163, %v1147, 1.0
    %v1180 = vsel %vm1164, %v1148, 1.0
    %v1181 = vsel %vm1165, %v1149, 1.0
    %v1182 = vsel %vm1166, %v1150, 1.0
    %v1183 = vsel %vm1167, %v1151, 1.0
    %v1184 = vsel %vm1168, %v1152, 1.0
    %v1185 = vrcp.pop %v1169
    %v1186 = vrcp.pop %v1170
    %v1187 = vrcp.pop %v1171
    %v1188 = vrcp.pop %v1172
    %v1189 = vrcp.pop %v1173
    %v1190 = vrcp.pop %v1174
    %v1191 = vrcp.pop %v1175
    %v1192 = vrcp.pop %v1176
    %v1193 = vrcp.pop %v1177
    %v1194 = vrcp.pop %v1178
    %v1195 = vrcp.pop %v1179
    %v1196 = vrcp.pop %v1180
    %v1197 = vrcp.pop %v1181
    %v1198 = vrcp.pop %v1182
    %v1199 = vrcp.pop %v1183
    %v1200 = vrcp.pop %v1184
    %v1201 = vld [vmem:[#allocation4] sm:$0xff]
    %v1202 = vld [vmem:[#allocation4 + $0x8] sm:$0xff]
    %v1203 = vld [vmem:[#allocation4 + $0x10] sm:$0xff]
    %v1204 = vld [vmem:[#allocation4 + $0x18] sm:$0xff]
    %v1205 = vld [vmem:[#allocation4 + $0x20] sm:$0xff]
    %v1206 = vld [vmem:[#allocation4 + $0x28] sm:$0xff]
    %v1207 = vld [vmem:[#allocation4 + $0x30] sm:$0xff]
    %v1208 = vld [vmem:[#allocation4 + $0x38] sm:$0xff]
    %v1209 = vld [vmem:[#allocation4 + $0x40] sm:$0xff]
    %v1210 = vld [vmem:[#allocation4 + $0x48] sm:$0xff]
    %v1211 = vld [vmem:[#allocation4 + $0x50] sm:$0xff]
    %v1212 = vld [vmem:[#allocation4 + $0x58] sm:$0xff]
    %v1213 = vld [vmem:[#allocation4 + $0x60] sm:$0xff]
    %v1214 = vld [vmem:[#allocation4 + $0x68] sm:$0xff]
    %v1215 = vld [vmem:[#allocation4 + $0x70] sm:$0xff]
    %v1216 = vld [vmem:[#allocation4 + $0x78] sm:$0xff]
    %1218 = vset.pattern.permute.xlu0 0
    %1219 = vperm.xlu0 %1218, %v1185
    %v1220 = vpop.permute.xlu0 %1219
    %1223 = vset.pattern.permute.xlu0 0
    %1224 = vperm.xlu0 %1223, %v1186
    %v1225 = vpop.permute.xlu0 %1224
    %1228 = vset.pattern.permute.xlu0 0
    %1229 = vperm.xlu0 %1228, %v1187
    %v1230 = vpop.permute.xlu0 %1229
    %1233 = vset.pattern.permute.xlu0 0
    %1234 = vperm.xlu0 %1233, %v1188
    %v1235 = vpop.permute.xlu0 %1234
    %1238 = vset.pattern.permute.xlu0 0
    %1239 = vperm.xlu0 %1238, %v1189
    %v1240 = vpop.permute.xlu0 %1239
    %1243 = vset.pattern.permute.xlu0 0
    %1244 = vperm.xlu0 %1243, %v1190
    %v1245 = vpop.permute.xlu0 %1244
    %1248 = vset.pattern.permute.xlu0 0
    %1249 = vperm.xlu0 %1248, %v1191
    %v1250 = vpop.permute.xlu0 %1249
    %1253 = vset.pattern.permute.xlu0 0
    %1254 = vperm.xlu0 %1253, %v1192
    %v1255 = vpop.permute.xlu0 %1254
    %1258 = vset.pattern.permute.xlu0 0
    %1259 = vperm.xlu0 %1258, %v1193
    %v1260 = vpop.permute.xlu0 %1259
    %1263 = vset.pattern.permute.xlu0 0
    %1264 = vperm.xlu0 %1263, %v1194
    %v1265 = vpop.permute.xlu0 %1264
    %1268 = vset.pattern.permute.xlu0 0
    %1269 = vperm.xlu0 %1268, %v1195
    %v1270 = vpop.permute.xlu0 %1269
    %1273 = vset.pattern.permute.xlu0 0
    %1274 = vperm.xlu0 %1273, %v1196
    %v1275 = vpop.permute.xlu0 %1274
    %1278 = vset.pattern.permute.xlu0 0
    %1279 = vperm.xlu0 %1278, %v1197
    %v1280 = vpop.permute.xlu0 %1279
    %1283 = vset.pattern.permute.xlu0 0
    %1284 = vperm.xlu0 %1283, %v1198
    %v1285 = vpop.permute.xlu0 %1284
    %1288 = vset.pattern.permute.xlu0 0
    %1289 = vperm.xlu0 %1288, %v1199
    %v1290 = vpop.permute.xlu0 %1289
    %1293 = vset.pattern.permute.xlu0 0
    %1294 = vperm.xlu0 %1293, %v1200
    %v1295 = vpop.permute.xlu0 %1294
    %v1297 = vmul.f32 %v1201, %v1220
    %v1298 = vmul.f32 %v1202, %v1225
    %v1299 = vmul.f32 %v1203, %v1230
    %v1300 = vmul.f32 %v1204, %v1235
    %v1301 = vmul.f32 %v1205, %v1240
    %v1302 = vmul.f32 %v1206, %v1245
    %v1303 = vmul.f32 %v1207, %v1250
    %v1304 = vmul.f32 %v1208, %v1255
    %v1305 = vmul.f32 %v1209, %v1260
    %v1306 = vmul.f32 %v1210, %v1265
    %v1307 = vmul.f32 %v1211, %v1270
    %v1308 = vmul.f32 %v1212, %v1275
    %v1309 = vmul.f32 %v1213, %v1280
    %v1310 = vmul.f32 %v1214, %v1285
    %v1311 = vmul.f32 %v1215, %v1290
    %v1312 = vmul.f32 %v1216, %v1295
    %v1313 = vld [vmem:[%s6] sm:$0x1]
    %v1315 = vlaneseq
    %v1316 = vshrl.u32 %v1315, 7
    %v1317 = vsub.s32 0, %v1316
    %v1318 = vrot.slane %v1313, %v1317
    %v1320 = vadd.f32 %v1297, %v1318
    %v1321 = vadd.f32 %v1298, %v1318
    %v1322 = vadd.f32 %v1299, %v1318
    %v1323 = vadd.f32 %v1300, %v1318
    %v1324 = vadd.f32 %v1301, %v1318
    %v1325 = vadd.f32 %v1302, %v1318
    %v1326 = vadd.f32 %v1303, %v1318
    %v1327 = vadd.f32 %v1304, %v1318
    %v1328 = vadd.f32 %v1305, %v1318
    %v1329 = vadd.f32 %v1306, %v1318
    %v1330 = vadd.f32 %v1307, %v1318
    %v1331 = vadd.f32 %v1308, %v1318
    %v1332 = vadd.f32 %v1309, %v1318
    %v1333 = vadd.f32 %v1310, %v1318
    %v1334 = vadd.f32 %v1311, %v1318
    %v1335 = vadd.f32 %v1312, %v1318
    %v1336 = vpack.c.bf16 %v1321, %v1320
    %v1337 = vpack.c.bf16 %v1323, %v1322
    %v1338 = vpack.c.bf16 %v1325, %v1324
    %v1339 = vpack.c.bf16 %v1327, %v1326
    %v1340 = vpack.c.bf16 %v1329, %v1328
    %v1341 = vpack.c.bf16 %v1331, %v1330
    %v1342 = vpack.c.bf16 %v1333, %v1332
    %v1343 = vpack.c.bf16 %v1335, %v1334
    %v1344 = vld [vmem:[%s7] sm:$0xf]
    %v1345 = vld [vmem:[%s7 + $0x4] sm:$0xf]
    %v1346 = vld [vmem:[%s7 + $0x8] sm:$0xf]
    %v1347 = vld [vmem:[%s7 + $0xc] sm:$0xf]
    %v1348 = vld [vmem:[%s7 + $0x10] sm:$0xf]
    %v1349 = vld [vmem:[%s7 + $0x14] sm:$0xf]
    %v1350 = vld [vmem:[%s7 + $0x18] sm:$0xf]
    %v1351 = vld [vmem:[%s7 + $0x1c] sm:$0xf]
    %v1352 = vld [vmem:[%s7 + $0x20] sm:$0xf]
    %v1353 = vld [vmem:[%s7 + $0x24] sm:$0xf]
    %v1354 = vld [vmem:[%s7 + $0x28] sm:$0xf]
    %v1355 = vld [vmem:[%s7 + $0x2c] sm:$0xf]
    %v1356 = vld [vmem:[%s7 + $0x30] sm:$0xf]
    %v1357 = vld [vmem:[%s7 + $0x34] sm:$0xf]
    %v1358 = vld [vmem:[%s7 + $0x38] sm:$0xf]
    %v1359 = vld [vmem:[%s7 + $0x3c] sm:$0xf]
    %v1360 = vld [vmem:[%s8] sm:$0x1]
    %v1362 = vlaneseq
    %v1363 = vshrl.u32 %v1362, 7
    %v1364 = vsub.s32 0, %v1363
    %v1365 = vrot.slane %v1360, %v1364
    %v1383 = vunpack.c.l.b16 %v1344
    %v1384 = vunpack.c.l.b16 %v1345
    %v1385 = vunpack.c.l.b16 %v1346
    %v1386 = vunpack.c.l.b16 %v1347
    %v1387 = vunpack.c.l.b16 %v1348
    %v1388 = vunpack.c.l.b16 %v1349
    %v1389 = vunpack.c.l.b16 %v1350
    %v1390 = vunpack.c.l.b16 %v1351
    %v1391 = vunpack.c.l.b16 %v1352
    %v1392 = vunpack.c.l.b16 %v1353
    %v1393 = vunpack.c.l.b16 %v1354
    %v1394 = vunpack.c.l.b16 %v1355
    %v1395 = vunpack.c.l.b16 %v1356
    %v1396 = vunpack.c.l.b16 %v1357
    %v1397 = vunpack.c.l.b16 %v1358
    %v1398 = vunpack.c.l.b16 %v1359
    %v1399 = vpack.c.b16 %v1384, %v1383
    %v1400 = vpack.c.b16 %v1386, %v1385
    %v1401 = vpack.c.b16 %v1388, %v1387
    %v1402 = vpack.c.b16 %v1390, %v1389
    %v1403 = vpack.c.b16 %v1392, %v1391
    %v1404 = vpack.c.b16 %v1394, %v1393
    %v1405 = vpack.c.b16 %v1396, %v1395
    %v1406 = vpack.c.b16 %v1398, %v1397
    %1415 = vmatprep.subr.bf16.mxu0 0
    %1416 = vmatpush1.bf16.msra.mxu0 %v1406
    %1417 = vmatprep.subr.bf16.mxu0 0
    %1418 = vmatpush1.bf16.msra.mxu0 %v1405
    %1419 = vmatprep.subr.bf16.mxu0 0
    %1420 = vmatpush1.bf16.msra.mxu0 %v1404
    %1421 = vmatprep.subr.bf16.mxu0 0
    %1422 = vmatpush1.bf16.msra.mxu0 %v1403
    %1423 = vmatprep.subr.bf16.mxu0 0
    %1424 = vmatpush1.bf16.msra.mxu0 %v1402
    %1425 = vmatprep.subr.bf16.mxu0 0
    %1426 = vmatpush1.bf16.msra.mxu0 %v1401
    %1427 = vmatprep.subr.bf16.mxu0 0
    %1428 = vmatpush1.bf16.msra.mxu0 %v1400
    %1429 = vmatprep.subr.bf16.mxu0 0
    %1430 = vmatpush1.bf16.msra.mxu0 %v1399
    %1431 = vmatprep.subr.bf16.mxu0 0
    %1432 = vmatpush2.bf16.msra.mxu0 0
    %1433 = vmatprep.subr.bf16.mxu0 0
    %1434 = vmatpush2.bf16.msra.mxu0 0
    %1435 = vmatprep.subr.bf16.mxu0 0
    %1436 = vmatpush2.bf16.msra.mxu0 0
    %1437 = vmatprep.subr.bf16.mxu0 0
    %1438 = vmatpush2.bf16.msra.mxu0 0
    %1439 = vmatprep.subr.bf16.mxu0 0
    %1440 = vmatpush2.bf16.msra.mxu0 0
    %1441 = vmatprep.subr.bf16.mxu0 0
    %1442 = vmatpush2.bf16.msra.mxu0 0
    %1443 = vmatprep.subr.bf16.mxu0 0
    %1444 = vmatpush2.bf16.msra.mxu0 0
    %1445 = vmatprep.subr.bf16.mxu0 0
    %1446 = vmatpush2.bf16.msra.mxu0 0
    %1447 = vmatprep.mubr.bf16.mxu0 0
    %1448 = vmatmul.mubr.bf16.gmra.mxu0 %v1336
    %v1449 = vpop.f32.mrf.mxu0
    %v1450 = vadd.f32 %v1365, %v1449
    %v1451 = vpop.f32.mrf.mxu0
    %v1452 = vpop.f32.mrf.mxu0
    %v1453 = vadd.f32 %v1365, %v1452
    %v1454 = vpop.f32.mrf.mxu0
    %1455 = vmatprep.mubr.bf16.mxu0 0
    %1456 = vmatmul.mubr.bf16.gmra.mxu0 %v1337
    %v1457 = vpop.f32.mrf.mxu0
    %v1458 = vadd.f32 %v1365, %v1457
    %v1459 = vpop.f32.mrf.mxu0
    %v1460 = vpop.f32.mrf.mxu0
    %v1461 = vadd.f32 %v1365, %v1460
    %v1462 = vpop.f32.mrf.mxu0
    %1463 = vmatprep.mubr.bf16.mxu0 0
    %1464 = vmatmul.mubr.bf16.gmra.mxu0 %v1338
    %v1465 = vpop.f32.mrf.mxu0
    %v1466 = vadd.f32 %v1365, %v1465
    %v1467 = vpop.f32.mrf.mxu0
    %v1468 = vpop.f32.mrf.mxu0
    %v1469 = vadd.f32 %v1365, %v1468
    %v1470 = vpop.f32.mrf.mxu0
    %1471 = vmatprep.mubr.bf16.mxu0 0
    %1472 = vmatmul.mubr.bf16.gmra.mxu0 %v1339
    %v1473 = vpop.f32.mrf.mxu0
    %v1474 = vadd.f32 %v1365, %v1473
    %v1475 = vpop.f32.mrf.mxu0
    %v1476 = vpop.f32.mrf.mxu0
    %v1477 = vadd.f32 %v1365, %v1476
    %v1478 = vpop.f32.mrf.mxu0
    %1479 = vmatprep.mubr.bf16.mxu0 0
    %1480 = vmatmul.mubr.bf16.gmra.mxu0 %v1340
    %v1481 = vpop.f32.mrf.mxu0
    %v1482 = vadd.f32 %v1365, %v1481
    %v1483 = vpop.f32.mrf.mxu0
    %v1484 = vpop.f32.mrf.mxu0
    %v1485 = vadd.f32 %v1365, %v1484
    %v1486 = vpop.f32.mrf.mxu0
    %1487 = vmatprep.mubr.bf16.mxu0 0
    %1488 = vmatmul.mubr.bf16.gmra.mxu0 %v1341
    %v1489 = vpop.f32.mrf.mxu0
    %v1490 = vadd.f32 %v1365, %v1489
    %v1491 = vpop.f32.mrf.mxu0
    %v1492 = vpop.f32.mrf.mxu0
    %v1493 = vadd.f32 %v1365, %v1492
    %v1494 = vpop.f32.mrf.mxu0
    %1495 = vmatprep.mubr.bf16.mxu0 0
    %1496 = vmatmul.mubr.bf16.gmra.mxu0 %v1342
    %v1497 = vpop.f32.mrf.mxu0
    %v1498 = vadd.f32 %v1365, %v1497
    %v1499 = vpop.f32.mrf.mxu0
    %v1500 = vpop.f32.mrf.mxu0
    %v1501 = vadd.f32 %v1365, %v1500
    %v1502 = vpop.f32.mrf.mxu0
    %1503 = vmatprep.mubr.bf16.mxu0 0
    %1504 = vmatmul.mubr.bf16.gmra.mxu0 %v1343
    %v1505 = vpop.f32.mrf.mxu0
    %v1506 = vadd.f32 %v1365, %v1505
    %v1507 = vpop.f32.mrf.mxu0
    %v1508 = vpop.f32.mrf.mxu0
    %v1509 = vadd.f32 %v1365, %v1508
    %v1510 = vpop.f32.mrf.mxu0
    %1511 = vdwg.mxu0
    %1512 = vst [vmem:[%s9] sm:$0xff] %v1450
    %1513 = vst [vmem:[%s9 + $0x8] sm:$0xff] %v1453
    %1514 = vst [vmem:[%s9 + $0x10] sm:$0xff] %v1458
    %1515 = vst [vmem:[%s9 + $0x18] sm:$0xff] %v1461
    %1516 = vst [vmem:[%s9 + $0x20] sm:$0xff] %v1466
    %1517 = vst [vmem:[%s9 + $0x28] sm:$0xff] %v1469
    %1518 = vst [vmem:[%s9 + $0x30] sm:$0xff] %v1474
    %1519 = vst [vmem:[%s9 + $0x38] sm:$0xff] %v1477
    %1520 = vst [vmem:[%s9 + $0x40] sm:$0xff] %v1482
    %1521 = vst [vmem:[%s9 + $0x48] sm:$0xff] %v1485
    %1522 = vst [vmem:[%s9 + $0x50] sm:$0xff] %v1490
    %1523 = vst [vmem:[%s9 + $0x58] sm:$0xff] %v1493
    %1524 = vst [vmem:[%s9 + $0x60] sm:$0xff] %v1498
    %1525 = vst [vmem:[%s9 + $0x68] sm:$0xff] %v1501
    %1526 = vst [vmem:[%s9 + $0x70] sm:$0xff] %v1506
    %1527 = vst [vmem:[%s9 + $0x78] sm:$0xff] %v1509
  $region41: #{hetero_gat_forward.6} parent=0 // pred_fallthru
    _
  // Predicated region
  $region42: #{hetero_gat_forward.6} parent=0 // pred_check
    _
  $region43: #{hetero_gat_forward.6} parent=0 // pred_check_branch
    %1529 = sbr.rel (0) target = $region45
  $region44: #{hetero_gat_forward.6} parent=0 // pred_region
    _
  $region45: #{hetero_gat_forward.6} parent=0 // pred_fallthru
    _
  // Predicated region
  $region46: #{hetero_gat_forward.6} parent=0 // pred_check
    _
  $region47: #{hetero_gat_forward.6} parent=0 // pred_check_branch
    %1531 = sbr.rel (0) target = $region49
  $region48: #{hetero_gat_forward.6} parent=0 // pred_region
    _
  $region49: #{hetero_gat_forward.6} parent=0 // pred_fallthru
    _

</llo_original>
